<compile_context>
chip_gen: v7x
topology: tpu7x:2x2x1
jax: 0.10.0
libtpu: 0.0.40
codegen_flags: <defaults>
</compile_context>

<pallas_src>
import functools
import math

import jax
import jax.numpy as jnp
from jax.experimental import pallas as pl
from jax.experimental.pallas import tpu as pltpu

POOL_SIZES = (1, 2, 4, 8)


# ----------------------------------------------------------------------------
# Host-side construction of the constant pooling / interpolation operators.
# ----------------------------------------------------------------------------
def _pool_matrix(out_size, in_size, pad_to):
    """(pad_to, in_size) adaptive-average-pool matrix (PyTorch bin semantics)."""
    m = [[0.0] * in_size for _ in range(pad_to)]
    for i in range(out_size):
        start = (i * in_size) // out_size
        end = ((i + 1) * in_size + out_size - 1) // out_size  # ceil
        inv = 1.0 / float(end - start)
        for k in range(start, end):
            m[i][k] = inv
    return m


def _upsample_matrix(out_size, in_size, pad_to):
    """(out_size, pad_to) bilinear align_corners=True interpolation matrix."""
    m = [[0.0] * pad_to for _ in range(out_size)]
    if in_size == 1 or out_size == 1:
        for i in range(out_size):
            m[i][0] = 1.0
        return m
    scale = (in_size - 1) / (out_size - 1)
    for i in range(out_size):
        coord = i * scale
        lo = min(int(math.floor(coord)), in_size - 1)
        hi = min(lo + 1, in_size - 1)
        fr = coord - lo
        m[i][lo] += 1.0 - fr
        m[i][hi] += fr
    return m


def _build_operators(scales, h, w, s_max, sblk):
    """Kronecker pool / upsample operators with lane-aligned per-scale blocks.

    Returns
      kp_all : (H*W, S*SBLK)  pooled_flat[c, si*SBLK + j*S_MAX + k] via x_flat @ kp_all
      ku_all : (S, SBLK, H*W) up_flat = g_flat @ ku_all[si]
    """
    kp_blocks, ku_blocks = [], []
    pad = sblk - s_max * s_max
    for s in scales:
        ph = jnp.asarray(_pool_matrix(s, h, s_max), jnp.float32)       # (S_MAX, H)
        pw = jnp.asarray(_pool_matrix(s, w, s_max), jnp.float32)       # (S_MAX, W)
        uh = jnp.asarray(_upsample_matrix(h, s, s_max), jnp.float32)   # (H, S_MAX)
        uw = jnp.asarray(_upsample_matrix(w, s, s_max), jnp.float32)   # (W, S_MAX)
        # pooled[j,k] = sum_{hh,ww} ph[j,hh] x[hh,ww] pw[k,ww]
        kp = jnp.einsum('jh,kw->hwjk', ph, pw).reshape(h * w, s_max * s_max)
        # up[hh,ww] = sum_{j,k} uh[hh,j] g[j,k] uw[ww,k]
        ku = jnp.einsum('hj,wk->jkhw', uh, uw).reshape(s_max * s_max, h * w)
        kp_blocks.append(jnp.pad(kp, ((0, 0), (0, pad))))
        ku_blocks.append(jnp.pad(ku, ((0, pad), (0, 0))))
    kp_all = jnp.concatenate(kp_blocks, axis=1)     # (HW, S*SBLK)
    ku_all = jnp.stack(ku_blocks, axis=0)           # (S, SBLK, HW)
    return kp_all, ku_all


# ----------------------------------------------------------------------------
# Pallas kernel: fused pool + 1x1 conv + bilinear upsample + channel concat.
# ----------------------------------------------------------------------------
def _ppm_kernel(w_ref, b_ref, kp_ref, ku_ref, x_ref, o_ref, *,
                c_in, c_out, num_scales, sblk):
    # w_ref  : (S, c_out, C)      VMEM   1x1 conv weights (resident)
    # b_ref  : (S, c_out, 1)      VMEM   1x1 conv bias    (resident)
    # kp_ref : (H*W, S*SBLK)      VMEM   Kronecker pooling operator (resident)
    # ku_ref : (S, SBLK, H*W)     VMEM   Kronecker upsample operator (resident)
    # x_ref  : (1, C, H*W)        VMEM   one batch element, lane-dense
    # o_ref  : (1, C + S*c_out, H*W)     lane-dense output
    x = x_ref[0]                                                     # (C, HW)

    # Pass-through: first C output channels are the input itself (the concat).
    o_ref[0, 0:c_in, :] = x

    # Adaptive average pooling for ALL channels and ALL scales: one MXU matmul.
    pooled = jnp.dot(x, kp_ref[...], preferred_element_type=jnp.float32)  # (C, S*SBLK)

    for si in range(num_scales):                    # static unroll over scales
        p_si = pooled[:, si * sblk:(si + 1) * sblk]                  # (C, SBLK) lane-aligned
        # 1x1 conv (channel mix) on the MXU, all output channels at once.
        g = jnp.dot(w_ref[si], p_si, preferred_element_type=jnp.float32)   # (c_out, SBLK)
        # Bilinear upsample (H and W together), all output channels at once.
        up = jnp.dot(g, ku_ref[si], preferred_element_type=jnp.float32)    # (c_out, HW)
        # Bias after upsample is exact: align_corners interpolation rows sum to 1.
        o_ref[0, c_in + si * c_out:c_in + (si + 1) * c_out, :] = up + b_ref[si]


# ----------------------------------------------------------------------------
# Wrapper
# ----------------------------------------------------------------------------
def pyramid_pooling_module(x, conv_w, conv_b, pool_sizes=POOL_SIZES):
    """x: (N, C, H, W); conv_w: (S, C//S, C); conv_b: (S, C//S) -> (N, 2C, H, W)."""
    n, c, h, w = x.shape
    scales = tuple(pool_sizes)
    num_scales = len(scales)
    assert c % num_scales == 0, "in_channels must be divisible by len(pool_sizes)"
    c_out = c // num_scales
    c_total = c + num_scales * c_out
    s_max = max(scales)
    hw = h * w
    sblk = max(128, pl.cdiv(s_max * s_max, 128) * 128)   # lane-aligned per-scale block

    kp_all, ku_all = _build_operators(scales, h, w, s_max, sblk)
    w_vmem = conv_w.astype(jnp.float32)                              # (S, c_out, C)
    b_vmem = conv_b.astype(jnp.float32).reshape(num_scales, c_out, 1)
    x2 = x.astype(jnp.float32).reshape(n, c, hw)                     # lane-dense input

    # Advisory cost estimate so XLA schedules around this HBM-bound call.
    flops_per = (2 * c * hw * num_scales * sblk
                 + num_scales * (2 * c_out * c * sblk + 2 * c_out * sblk * hw))
    bytes_per = (c * hw + c_total * hw) * 4
    const_bytes = (hw * num_scales * sblk + num_scales * sblk * hw
                   + num_scales * c_out * c + num_scales * c_out) * 4

    kernel = functools.partial(_ppm_kernel, c_in=c, c_out=c_out,
                               num_scales=num_scales, sblk=sblk)

    out = pl.pallas_call(
        kernel,
        out_shape=jax.ShapeDtypeStruct((n, c_total, hw), jnp.float32),
        grid_spec=pltpu.PrefetchScalarGridSpec(
            num_scalar_prefetch=0,
            grid=(n,),
            in_specs=[
                pl.BlockSpec((num_scales, c_out, c), lambda i: (0, 0, 0)),   # conv W (resident)
                pl.BlockSpec((num_scales, c_out, 1), lambda i: (0, 0, 0)),   # bias   (resident)
                pl.BlockSpec((hw, num_scales * sblk), lambda i: (0, 0)),     # KP     (resident)
                pl.BlockSpec((num_scales, sblk, hw), lambda i: (0, 0, 0)),   # KU     (resident)
                pl.BlockSpec((1, c, hw), lambda i: (i, 0, 0)),               # one batch element
            ],
            out_specs=pl.BlockSpec((1, c_total, hw), lambda i: (i, 0, 0)),
        ),
        compiler_params=pltpu.CompilerParams(
            dimension_semantics=("parallel",)),
        cost_estimate=pl.CostEstimate(
            flops=n * flops_per,
            transcendentals=0,
            bytes_accessed=n * bytes_per + const_bytes),
    )(w_vmem, b_vmem, kp_all, ku_all, x2)
    return out.reshape(n, c_total, h, w)


# ----------------------------------------------------------------------------
# Pure-JAX reference (independent of the Kronecker formulation above).
# ----------------------------------------------------------------------------
def _adaptive_avg_pool_ref(x, s):
    _, _, h, w = x.shape
    rows = []
    for i in range(s):
        h0 = (i * h) // s
        h1 = ((i + 1) * h + s - 1) // s
        cols = []
        for j in range(s):
            w0 = (j * w) // s
            w1 = ((j + 1) * w + s - 1) // s
            cols.append(jnp.mean(x[:, :, h0:h1, w0:w1], axis=(2, 3)))
        rows.append(jnp.stack(cols, axis=-1))
    return jnp.stack(rows, axis=-2)                         # (N, C, s, s)


def _bilinear_upsample_ref(g, out_h, out_w):
    def interp(arr, out_size, axis):
        in_size = arr.shape[axis]
        if in_size == 1:
            return jnp.repeat(arr, out_size, axis=axis)
        coords = jnp.arange(out_size, dtype=jnp.float32) * ((in_size - 1) / (out_size - 1))
        lo = jnp.minimum(jnp.floor(coords).astype(jnp.int32), in_size - 1)
        hi = jnp.minimum(lo + 1, in_size - 1)
        fr = coords - lo.astype(jnp.float32)
        a_lo = jnp.take(arr, lo, axis=axis)
        a_hi = jnp.take(arr, hi, axis=axis)
        shape = [1] * arr.ndim
        shape[axis] = out_size
        fr = fr.reshape(shape)
        return a_lo * (1.0 - fr) + a_hi * fr

    return interp(interp(g, out_h, 2), out_w, 3)


def _reference_ppm(x, conv_w, conv_b, pool_sizes=POOL_SIZES):
    _, c, h, w = x.shape
    c_out = conv_w.shape[1]
    feats = [x]
    for si, s in enumerate(pool_sizes):
        pooled = _adaptive_avg_pool_ref(x, s)               # (N, C, s, s)
        convs = []
        for o in range(c_out):                              # exact f32 channel mix
            acc = conv_b[si, o] * jnp.ones_like(pooled[:, 0])
            for ci in range(c):
                acc = acc + conv_w[si, o, ci] * pooled[:, ci]
            convs.append(acc)
        conv = jnp.stack(convs, axis=1)                     # (N, C_OUT, s, s)
        feats.append(_bilinear_upsample_ref(conv, h, w))
    return jnp.concatenate(feats, axis=1)


if __name__ == "__main__":
    key = jax.random.PRNGKey(0)
    kx, kw, kb = jax.random.split(key, 3)

    n, c, h, w = 2, 4, 16, 16
    num_scales = len(POOL_SIZES)
    c_out = c // num_scales

    x = jax.random.normal(kx, (n, c, h, w), dtype=jnp.float32)
    conv_w = 0.1 * jax.random.normal(kw, (num_scales, c_out, c), dtype=jnp.float32)
    conv_b = 0.1 * jax.random.normal(kb, (num_scales, c_out), dtype=jnp.float32)

    out = pyramid_pooling_module(x, conv_w, conv_b)
    out = jax.block_until_ready(out)

    ref = _reference_ppm(x, conv_w, conv_b)
    assert out.shape == (n, c + num_scales * c_out, h, w), out.shape
    max_err = float(jnp.max(jnp.abs(out - ref)))
    assert jnp.allclose(out, ref, atol=2e-3, rtol=2e-3), f"mismatch vs reference, max err {max_err}"

    print("KERNEL_OK")
</pallas_src>

<mosaic_0001>
module attributes {stable_mosaic.version = 11 : i64} {
  func.func @_ppm_kernel(%arg0: i32, %arg1: memref<4x1x4xf32, #tpu.memory_space<vmem>>, %arg2: memref<4x1x1xf32, #tpu.memory_space<vmem>>, %arg3: memref<256x512xf32, #tpu.memory_space<vmem>>, %arg4: memref<4x128x256xf32, #tpu.memory_space<vmem>>, %arg5: memref<1x4x256xf32, #tpu.memory_space<vmem>>, %arg6: memref<1x8x256xf32, #tpu.memory_space<vmem>>) attributes {dimension_semantics = [#tpu.dimension_semantics<parallel>], iteration_bounds = array<i64: 2>, scalar_prefetch = 0 : i64, scratch_operands = 0 : i64, tpu.core_type = #tpu.core_type<tc>, window_params = [{pipeline_mode = #tpu.pipeline_mode<synchronous>, transform_indices = @transform_0, window_bounds = array<i64: 4, 1, 4>}, {pipeline_mode = #tpu.pipeline_mode<synchronous>, transform_indices = @transform_1, window_bounds = array<i64: 4, 1, 1>}, {pipeline_mode = #tpu.pipeline_mode<synchronous>, transform_indices = @transform_2, window_bounds = array<i64: 256, 512>}, {pipeline_mode = #tpu.pipeline_mode<synchronous>, transform_indices = @transform_3, window_bounds = array<i64: 4, 128, 256>}, {transform_indices = @transform_4, window_bounds = array<i64: 1, 4, 256>}, {transform_indices = @transform_5, window_bounds = array<i64: 1, 8, 256>}]} {
    %c0 = arith.constant 0 : index
    %c0_0 = arith.constant 0 : index
    %c0_1 = arith.constant 0 : index
    %0 = vector.load %arg5[%c0, %c0_0, %c0_1] : memref<1x4x256xf32, #tpu.memory_space<vmem>>, vector<1x4x256xf32>
    %1 = vector.shape_cast %0 : vector<1x4x256xf32> to vector<4x256xf32>
    %c0_2 = arith.constant 0 : index
    %c0_3 = arith.constant 0 : index
    %c0_4 = arith.constant 0 : index
    %2 = vector.load %arg6[%c0_2, %c0_3, %c0_4] : memref<1x8x256xf32, #tpu.memory_space<vmem>>, vector<1x4x256xf32>
    %3 = vector.shape_cast %2 : vector<1x4x256xf32> to vector<4x256xf32>
    %4 = vector.shape_cast %1 : vector<4x256xf32> to vector<1x4x256xf32>
    tpu.vector_store %arg6[%c0_2, %c0_3, %c0_4], %4 {strides = array<i32>} : memref<1x8x256xf32, #tpu.memory_space<vmem>>, vector<1x4x256xf32>,
    %c0_5 = arith.constant 0 : index
    %c0_6 = arith.constant 0 : index
    %5 = vector.load %arg3[%c0_5, %c0_6] : memref<256x512xf32, #tpu.memory_space<vmem>>, vector<256x512xf32>
    %cst = arith.constant dense<0.000000e+00> : vector<4x512xf32>
    %6 = tpu.matmul %1, %5, %cst {dimension_numbers = #tpu.dot_dimension_numbers<[1], [0], [0], [1], [0, 0, 1, 1], [], []>} : vector<4x256xf32>, vector<256x512xf32>, vector<4x512xf32> -> vector<4x512xf32>
    %7 = vector.extract_strided_slice %6 {offsets = [0, 0], sizes = [4, 128], strides = [1, 1]} : vector<4x512xf32> to vector<4x128xf32>
    %c0_7 = arith.constant 0 : index
    %c0_8 = arith.constant 0 : index
    %c0_9 = arith.constant 0 : index
    %8 = vector.load %arg1[%c0_7, %c0_8, %c0_9] : memref<4x1x4xf32, #tpu.memory_space<vmem>>, vector<1x1x4xf32>
    %9 = vector.shape_cast %8 : vector<1x1x4xf32> to vector<1x4xf32>
    %cst_10 = arith.constant dense<0.000000e+00> : vector<1x128xf32>
    %10 = tpu.matmul %9, %7, %cst_10 {dimension_numbers = #tpu.dot_dimension_numbers<[1], [0], [0], [1], [0, 0, 1, 1], [], []>} : vector<1x4xf32>, vector<4x128xf32>, vector<1x128xf32> -> vector<1x128xf32>
    %c0_11 = arith.constant 0 : index
    %c0_12 = arith.constant 0 : index
    %c0_13 = arith.constant 0 : index
    %11 = vector.load %arg4[%c0_11, %c0_12, %c0_13] : memref<4x128x256xf32, #tpu.memory_space<vmem>>, vector<1x128x256xf32>
    %12 = vector.shape_cast %11 : vector<1x128x256xf32> to vector<128x256xf32>
    %cst_14 = arith.constant dense<0.000000e+00> : vector<1x256xf32>
    %13 = tpu.matmul %10, %12, %cst_14 {dimension_numbers = #tpu.dot_dimension_numbers<[1], [0], [0], [1], [0, 0, 1, 1], [], []>} : vector<1x128xf32>, vector<128x256xf32>, vector<1x256xf32> -> vector<1x256xf32>
    %c0_15 = arith.constant 0 : index
    %c0_16 = arith.constant 0 : index
    %c0_17 = arith.constant 0 : index
    %14 = vector.load %arg2[%c0_15, %c0_16, %c0_17] : memref<4x1x1xf32, #tpu.memory_space<vmem>>, vector<1x1x1xf32>
    %15 = vector.shape_cast %14 : vector<1x1x1xf32> to vector<1x1xf32>
    %16 = vector.broadcast %15 : vector<1x1xf32> to vector<1x256xf32>
    %17 = arith.addf %13, %16 : vector<1x256xf32>
    %c0_18 = arith.constant 0 : index
    %c4 = arith.constant 4 : index
    %c0_19 = arith.constant 0 : index
    %18 = vector.load %arg6[%c0_18, %c4, %c0_19] : memref<1x8x256xf32, #tpu.memory_space<vmem>>, vector<1x1x256xf32>
    %19 = vector.shape_cast %18 : vector<1x1x256xf32> to vector<1x256xf32>
    %20 = vector.shape_cast %17 : vector<1x256xf32> to vector<1x1x256xf32>
    tpu.vector_store %arg6[%c0_18, %c4, %c0_19], %20 {strides = array<i32>} : memref<1x8x256xf32, #tpu.memory_space<vmem>>, vector<1x1x256xf32>,
    %21 = vector.extract_strided_slice %6 {offsets = [0, 128], sizes = [4, 128], strides = [1, 1]} : vector<4x512xf32> to vector<4x128xf32>
    %c1 = arith.constant 1 : index
    %c0_20 = arith.constant 0 : index
    %c0_21 = arith.constant 0 : index
    %22 = vector.load %arg1[%c1, %c0_20, %c0_21] : memref<4x1x4xf32, #tpu.memory_space<vmem>>, vector<1x1x4xf32>
    %23 = vector.shape_cast %22 : vector<1x1x4xf32> to vector<1x4xf32>
    %cst_22 = arith.constant dense<0.000000e+00> : vector<1x128xf32>
    %24 = tpu.matmul %23, %21, %cst_22 {dimension_numbers = #tpu.dot_dimension_numbers<[1], [0], [0], [1], [0, 0, 1, 1], [], []>} : vector<1x4xf32>, vector<4x128xf32>, vector<1x128xf32> -> vector<1x128xf32>
    %c1_23 = arith.constant 1 : index
    %c0_24 = arith.constant 0 : index
    %c0_25 = arith.constant 0 : index
    %25 = vector.load %arg4[%c1_23, %c0_24, %c0_25] : memref<4x128x256xf32, #tpu.memory_space<vmem>>, vector<1x128x256xf32>
    %26 = vector.shape_cast %25 : vector<1x128x256xf32> to vector<128x256xf32>
    %cst_26 = arith.constant dense<0.000000e+00> : vector<1x256xf32>
    %27 = tpu.matmul %24, %26, %cst_26 {dimension_numbers = #tpu.dot_dimension_numbers<[1], [0], [0], [1], [0, 0, 1, 1], [], []>} : vector<1x128xf32>, vector<128x256xf32>, vector<1x256xf32> -> vector<1x256xf32>
    %c1_27 = arith.constant 1 : index
    %c0_28 = arith.constant 0 : index
    %c0_29 = arith.constant 0 : index
    %28 = vector.load %arg2[%c1_27, %c0_28, %c0_29] : memref<4x1x1xf32, #tpu.memory_space<vmem>>, vector<1x1x1xf32>
    %29 = vector.shape_cast %28 : vector<1x1x1xf32> to vector<1x1xf32>
    %30 = vector.broadcast %29 : vector<1x1xf32> to vector<1x256xf32>
    %31 = arith.addf %27, %30 : vector<1x256xf32>
    %c0_30 = arith.constant 0 : index
    %c5 = arith.constant 5 : index
    %c0_31 = arith.constant 0 : index
    %32 = vector.load %arg6[%c0_30, %c5, %c0_31] : memref<1x8x256xf32, #tpu.memory_space<vmem>>, vector<1x1x256xf32>
    %33 = vector.shape_cast %32 : vector<1x1x256xf32> to vector<1x256xf32>
    %34 = vector.shape_cast %31 : vector<1x256xf32> to vector<1x1x256xf32>
    tpu.vector_store %arg6[%c0_30, %c5, %c0_31], %34 {strides = array<i32>} : memref<1x8x256xf32, #tpu.memory_space<vmem>>, vector<1x1x256xf32>,
    %35 = vector.extract_strided_slice %6 {offsets = [0, 256], sizes = [4, 128], strides = [1, 1]} : vector<4x512xf32> to vector<4x128xf32>
    %c2 = arith.constant 2 : index
    %c0_32 = arith.constant 0 : index
    %c0_33 = arith.constant 0 : index
    %36 = vector.load %arg1[%c2, %c0_32, %c0_33] : memref<4x1x4xf32, #tpu.memory_space<vmem>>, vector<1x1x4xf32>
    %37 = vector.shape_cast %36 : vector<1x1x4xf32> to vector<1x4xf32>
    %cst_34 = arith.constant dense<0.000000e+00> : vector<1x128xf32>
    %38 = tpu.matmul %37, %35, %cst_34 {dimension_numbers = #tpu.dot_dimension_numbers<[1], [0], [0], [1], [0, 0, 1, 1], [], []>} : vector<1x4xf32>, vector<4x128xf32>, vector<1x128xf32> -> vector<1x128xf32>
    %c2_35 = arith.constant 2 : index
    %c0_36 = arith.constant 0 : index
    %c0_37 = arith.constant 0 : index
    %39 = vector.load %arg4[%c2_35, %c0_36, %c0_37] : memref<4x128x256xf32, #tpu.memory_space<vmem>>, vector<1x128x256xf32>
    %40 = vector.shape_cast %39 : vector<1x128x256xf32> to vector<128x256xf32>
    %cst_38 = arith.constant dense<0.000000e+00> : vector<1x256xf32>
    %41 = tpu.matmul %38, %40, %cst_38 {dimension_numbers = #tpu.dot_dimension_numbers<[1], [0], [0], [1], [0, 0, 1, 1], [], []>} : vector<1x128xf32>, vector<128x256xf32>, vector<1x256xf32> -> vector<1x256xf32>
    %c2_39 = arith.constant 2 : index
    %c0_40 = arith.constant 0 : index
    %c0_41 = arith.constant 0 : index
    %42 = vector.load %arg2[%c2_39, %c0_40, %c0_41] : memref<4x1x1xf32, #tpu.memory_space<vmem>>, vector<1x1x1xf32>
    %43 = vector.shape_cast %42 : vector<1x1x1xf32> to vector<1x1xf32>
    %44 = vector.broadcast %43 : vector<1x1xf32> to vector<1x256xf32>
    %45 = arith.addf %41, %44 : vector<1x256xf32>
    %c0_42 = arith.constant 0 : index
    %c6 = arith.constant 6 : index
    %c0_43 = arith.constant 0 : index
    %46 = vector.load %arg6[%c0_42, %c6, %c0_43] : memref<1x8x256xf32, #tpu.memory_space<vmem>>, vector<1x1x256xf32>
    %47 = vector.shape_cast %46 : vector<1x1x256xf32> to vector<1x256xf32>
    %48 = vector.shape_cast %45 : vector<1x256xf32> to vector<1x1x256xf32>
    tpu.vector_store %arg6[%c0_42, %c6, %c0_43], %48 {strides = array<i32>} : memref<1x8x256xf32, #tpu.memory_space<vmem>>, vector<1x1x256xf32>,
    %49 = vector.extract_strided_slice %6 {offsets = [0, 384], sizes = [4, 128], strides = [1, 1]} : vector<4x512xf32> to vector<4x128xf32>
    %c3 = arith.constant 3 : index
    %c0_44 = arith.constant 0 : index
    %c0_45 = arith.constant 0 : index
    %50 = vector.load %arg1[%c3, %c0_44, %c0_45] : memref<4x1x4xf32, #tpu.memory_space<vmem>>, vector<1x1x4xf32>
    %51 = vector.shape_cast %50 : vector<1x1x4xf32> to vector<1x4xf32>
    %cst_46 = arith.constant dense<0.000000e+00> : vector<1x128xf32>
    %52 = tpu.matmul %51, %49, %cst_46 {dimension_numbers = #tpu.dot_dimension_numbers<[1], [0], [0], [1], [0, 0, 1, 1], [], []>} : vector<1x4xf32>, vector<4x128xf32>, vector<1x128xf32> -> vector<1x128xf32>
    %c3_47 = arith.constant 3 : index
    %c0_48 = arith.constant 0 : index
    %c0_49 = arith.constant 0 : index
    %53 = vector.load %arg4[%c3_47, %c0_48, %c0_49] : memref<4x128x256xf32, #tpu.memory_space<vmem>>, vector<1x128x256xf32>
    %54 = vector.shape_cast %53 : vector<1x128x256xf32> to vector<128x256xf32>
    %cst_50 = arith.constant dense<0.000000e+00> : vector<1x256xf32>
    %55 = tpu.matmul %52, %54, %cst_50 {dimension_numbers = #tpu.dot_dimension_numbers<[1], [0], [0], [1], [0, 0, 1, 1], [], []>} : vector<1x128xf32>, vector<128x256xf32>, vector<1x256xf32> -> vector<1x256xf32>
    %c3_51 = arith.constant 3 : index
    %c0_52 = arith.constant 0 : index
    %c0_53 = arith.constant 0 : index
    %56 = vector.load %arg2[%c3_51, %c0_52, %c0_53] : memref<4x1x1xf32, #tpu.memory_space<vmem>>, vector<1x1x1xf32>
    %57 = vector.shape_cast %56 : vector<1x1x1xf32> to vector<1x1xf32>
    %58 = vector.broadcast %57 : vector<1x1xf32> to vector<1x256xf32>
    %59 = arith.addf %55, %58 : vector<1x256xf32>
    %c0_54 = arith.constant 0 : index
    %c7 = arith.constant 7 : index
    %c0_55 = arith.constant 0 : index
    %60 = vector.load %arg6[%c0_54, %c7, %c0_55] : memref<1x8x256xf32, #tpu.memory_space<vmem>>, vector<1x1x256xf32>
    %61 = vector.shape_cast %60 : vector<1x1x256xf32> to vector<1x256xf32>
    %62 = vector.shape_cast %59 : vector<1x256xf32> to vector<1x1x256xf32>
    tpu.vector_store %arg6[%c0_54, %c7, %c0_55], %62 {strides = array<i32>} : memref<1x8x256xf32, #tpu.memory_space<vmem>>, vector<1x1x256xf32>,
    return
  }
  func.func @transform_0(%arg0: i32) -> (i32, i32, i32) {
    %c0_i32 = arith.constant 0 : i32
    %c0_i32_0 = arith.constant 0 : i32
    %c0_i32_1 = arith.constant 0 : i32
    %c0_i32_2 = arith.constant 0 : i32
    return %c0_i32, %c0_i32_0, %c0_i32_1 : i32, i32, i32
  }
  func.func @transform_1(%arg0: i32) -> (i32, i32, i32) {
    %c0_i32 = arith.constant 0 : i32
    %c0_i32_0 = arith.constant 0 : i32
    %c0_i32_1 = arith.constant 0 : i32
    %c0_i32_2 = arith.constant 0 : i32
    return %c0_i32, %c0_i32_0, %c0_i32_1 : i32, i32, i32
  }
  func.func @transform_2(%arg0: i32) -> (i32, i32) {
    %c0_i32 = arith.constant 0 : i32
    %c0_i32_0 = arith.constant 0 : i32
    %c0_i32_1 = arith.constant 0 : i32
    return %c0_i32, %c0_i32_0 : i32, i32
  }
  func.func @transform_3(%arg0: i32) -> (i32, i32, i32) {
    %c0_i32 = arith.constant 0 : i32
    %c0_i32_0 = arith.constant 0 : i32
    %c0_i32_1 = arith.constant 0 : i32
    %c0_i32_2 = arith.constant 0 : i32
    return %c0_i32, %c0_i32_0, %c0_i32_1 : i32, i32, i32
  }
  func.func @transform_4(%arg0: i32) -> (i32, i32, i32) {
    %c0_i32 = arith.constant 0 : i32
    %c0_i32_0 = arith.constant 0 : i32
    %c0_i32_1 = arith.constant 0 : i32
    return %arg0, %c0_i32, %c0_i32_0 : i32, i32, i32
  }
  func.func @transform_5(%arg0: i32) -> (i32, i32, i32) {
    %c0_i32 = arith.constant 0 : i32
    %c0_i32_0 = arith.constant 0 : i32
    %c0_i32_1 = arith.constant 0 : i32
    return %arg0, %c0_i32, %c0_i32_0 : i32, i32, i32
  }
}

</mosaic_0001>

<llo_original>
// kernel: tpu_custom_call.1
$region0: #{tpu_custom_call.1}
  #allocation0 [shape = 'u32[]', space=smem, size = 0x4, offset = 0x4, fixed_abs, tag = 'smem constant byte address 0x4 - core index']
  #allocation1 [shape = 'u32[144,128]{1,0:T(1,128)}', space=vmem, size = 0x12000, scoped, tag = 'internal scratch']
  %s0 = inlined_call_operand.vmem [shape: f32[4,1,4], index: 0, kind: input, shape index: {}]
  %s1 = inlined_call_operand.vmem [shape: f32[4,1,1], index: 1, kind: input, shape index: {}]
  %s2 = inlined_call_operand.hbm [shape: f32[256,512], index: 2, kind: input, shape index: {}]
  %s3 = inlined_call_operand.hbm [shape: f32[4,128,256], index: 3, kind: input, shape index: {}]
  %s4 = inlined_call_operand.vmem [shape: f32[2,4,256], index: 4, kind: input, shape index: {}]
  %s5 = inlined_call_operand.hbm [shape: f32[2,8,256], index: 5, kind: output, shape index: {}]
  %s6 = sld [smem:[#allocation0]]
  $region61: #{tpu_custom_call.1} parent=0
    _
  %s8 = ssub.s32 1, %s6
  %s9 = scalar_select 0, %s8, %s6
  $region1: #{tpu_custom_call.1} parent=0
    #allocation2 [shape = 'u8[524288]{0}', space=vmem, size = 0x80000, scoped, tag = 'input window, operand 2, single buffered']
    #allocation3 [shape = 's32[2]{0}', space=sflag, size = 0x8, scoped, tag = 'scoped memory for tpu_custom_call.1']
    #allocation4 [shape = 's32[2]{0}', space=sflag, size = 0x8, scoped, tag = 'scoped memory for tpu_custom_call.1']
    #allocation5 [shape = 'u8[524288]{0}', space=vmem, size = 0x80000, scoped, tag = 'input window, operand 3, single buffered']
    #allocation6 [shape = 's32[1]{0}', space=sflag, size = 0x4, scoped, tag = 'scoped memory for tpu_custom_call.1']
    #allocation7 [shape = 'u8[16384]{0}', space=vmem, size = 0x4000, scoped, tag = 'output window, operand 0']
    %10 = vsyncpa [#allocation3], 0
    %11 = vsyncpa [#allocation6], 0
    %12 = vsyncpa [#allocation4], 0
    %s13 = scalar_lea.sflag [#allocation4], 1
    %14 = vsyncpa %s13, 0
    loop: start=0, step=1, limit=4
    $region2: #{tpu_custom_call.1} parent=1 // loop_pre_header
      _
    $region3: #{tpu_custom_call.1} parent=1 // loop_header
      %s16 = sphi 0, %s20
      %p17 = scmp.ge.s32.totalorder %s16, 4
      %s24 = sphi 0, %s24
      %s26 = sphi 0, %s24
      %s27 = sphi 0, %s26
      %s41 = sphi 0, %s27
      %s45 = sphi 0, %s45
      %s47 = sphi 0, %s45
      %s48 = sphi 0, %s47
      %s62 = sphi 0, %s48
      %s66 = sphi 0, %s66
      %s68 = sphi 0, %s66
      %s69 = sphi 0, %s68
      %s83 = sphi 0, %s69
      %s87 = sphi 0, %s87
      %s89 = sphi 0, %s87
      %s90 = sphi 0, %s89
      %s104 = sphi 0, %s90
      %s110 = sphi 0, %s112
      %s113 = sphi 0, %s110
      %s114 = sphi 0, %s113
      %s130 = sphi 0, %s114
      %s136 = sphi 0, %s138
      %s139 = sphi 0, %s136
      %s140 = sphi 0, %s139
      %s156 = sphi 0, %s140
    $region4: #{tpu_custom_call.1} parent=1 // loop_header_branch
      %19 = sbr.rel (%p17) target = $region8
    $region5: #{tpu_custom_call.1} parent=1 // loop_body
      %s21 = ssub.s32 %s16, 1
      %s22 = ssub.s32 %s16, 2
      %s23 = sadd.s32 %s16, 1
      %s25 = sadd.s32 %s24, 1
      %p28 = scmp.eq.s32.totalorder %s16, 1
      %p29 = scmp.ne.s32.totalorder %s24, %s26
      %p30 = scmp.eq.s32.totalorder %s16, 0
      %p31 = por %p29, %p30
      %p32 = scmp.ne.s32.totalorder %s24, %s26
      %p33 = scmp.eq.s32.totalorder %s21, 1
      %p34 = por %p32, %p33
      %p35 = scmp.ne.s32.totalorder %s26, %s27
      %p36 = scmp.eq.s32.totalorder %s21, 0
      %p37 = por %p35, %p36
      %p38 = scmp.ne.s32.totalorder %s26, %s27
      %p39 = scmp.eq.s32.totalorder %s22, 1
      %p40 = por %p38, %p39
      %p42 = scmp.ne.s32.totalorder %s27, %s41
      %p43 = scmp.eq.s32.totalorder %s22, 0
      %p44 = por %p42, %p43
      %s46 = sadd.s32 %s45, 1
      %p49 = scmp.eq.s32.totalorder %s16, 1
      %p50 = scmp.ne.s32.totalorder %s45, %s47
      %p51 = scmp.eq.s32.totalorder %s16, 0
      %p52 = por %p50, %p51
      %p53 = scmp.ne.s32.totalorder %s45, %s47
      %p54 = scmp.eq.s32.totalorder %s21, 1
      %p55 = por %p53, %p54
      %p56 = scmp.ne.s32.totalorder %s47, %s48
      %p57 = scmp.eq.s32.totalorder %s21, 0
      %p58 = por %p56, %p57
      %p59 = scmp.ne.s32.totalorder %s47, %s48
      %p60 = scmp.eq.s32.totalorder %s22, 1
      %p61 = por %p59, %p60
      %p63 = scmp.ne.s32.totalorder %s48, %s62
      %p64 = scmp.eq.s32.totalorder %s22, 0
      %p65 = por %p63, %p64
      %s67 = sadd.s32 %s66, 1
      %p70 = scmp.eq.s32.totalorder %s16, 1
      %p71 = scmp.ne.s32.totalorder %s66, %s68
      %p72 = scmp.eq.s32.totalorder %s16, 0
      %p73 = por %p71, %p72
      %p74 = scmp.ne.s32.totalorder %s66, %s68
      %p75 = scmp.eq.s32.totalorder %s21, 1
      %p76 = por %p74, %p75
      %p77 = scmp.ne.s32.totalorder %s68, %s69
      %p78 = scmp.eq.s32.totalorder %s21, 0
      %p79 = por %p77, %p78
      %p80 = scmp.ne.s32.totalorder %s68, %s69
      %p81 = scmp.eq.s32.totalorder %s22, 1
      %p82 = por %p80, %p81
      %p84 = scmp.ne.s32.totalorder %s69, %s83
      %p85 = scmp.eq.s32.totalorder %s22, 0
      %p86 = por %p84, %p85
      %s88 = sadd.s32 %s87, 1
      %p91 = scmp.eq.s32.totalorder %s16, 1
      %p92 = scmp.ne.s32.totalorder %s87, %s89
      %p93 = scmp.eq.s32.totalorder %s16, 0
      %p94 = por %p92, %p93
      %p95 = scmp.ne.s32.totalorder %s87, %s89
      %p96 = scmp.eq.s32.totalorder %s21, 1
      %p97 = por %p95, %p96
      %p98 = scmp.ne.s32.totalorder %s89, %s90
      %p99 = scmp.eq.s32.totalorder %s21, 0
      %p100 = por %p98, %p99
      %p101 = scmp.ne.s32.totalorder %s89, %s90
      %p102 = scmp.eq.s32.totalorder %s22, 1
      %p103 = por %p101, %p102
      %p105 = scmp.ne.s32.totalorder %s90, %s104
      %p106 = scmp.eq.s32.totalorder %s22, 0
      %p107 = por %p105, %p106
      %s108 = ssub.s32 %s16, %s23
      %p109 = scmp.eq.s32.totalorder %s108, 0
      %s111 = sadd.s32 %s110, 1
      %s112 = scalar_select %p109, %s110, %s111
      %p115 = pneg %p109
      %p116 = scmp.eq.s32.totalorder %s16, 1
      %p117 = por %p115, %p116
      %p118 = scmp.ne.s32.totalorder %s110, %s113
      %p119 = scmp.eq.s32.totalorder %s16, 0
      %p120 = por %p118, %p119
      %p121 = scmp.ne.s32.totalorder %s110, %s113
      %p122 = scmp.eq.s32.totalorder %s21, 1
      %p123 = por %p121, %p122
      %p124 = scmp.ne.s32.totalorder %s113, %s114
      %p125 = scmp.eq.s32.totalorder %s21, 0
      %p126 = por %p124, %p125
      %p127 = scmp.ne.s32.totalorder %s113, %s114
      %p128 = scmp.eq.s32.totalorder %s22, 1
      %p129 = por %p127, %p128
      %p131 = scmp.ne.s32.totalorder %s114, %s130
      %p132 = scmp.eq.s32.totalorder %s22, 0
      %p133 = por %p131, %p132
      %s134 = ssub.s32 %s16, %s23
      %p135 = scmp.eq.s32.totalorder %s134, 0
      %s137 = sadd.s32 %s136, 1
      %s138 = scalar_select %p135, %s136, %s137
      %p141 = pneg %p135
      %p142 = scmp.eq.s32.totalorder %s16, 1
      %p143 = por %p141, %p142
      %p144 = scmp.ne.s32.totalorder %s136, %s139
      %p145 = scmp.eq.s32.totalorder %s16, 0
      %p146 = por %p144, %p145
      %p147 = scmp.ne.s32.totalorder %s136, %s139
      %p148 = scmp.eq.s32.totalorder %s21, 1
      %p149 = por %p147, %p148
      %p150 = scmp.ne.s32.totalorder %s139, %s140
      %p151 = scmp.eq.s32.totalorder %s21, 0
      %p152 = por %p150, %p151
      %p153 = scmp.ne.s32.totalorder %s139, %s140
      %p154 = scmp.eq.s32.totalorder %s22, 1
      %p155 = por %p153, %p154
      %p157 = scmp.ne.s32.totalorder %s140, %s156
      %p158 = scmp.eq.s32.totalorder %s22, 0
      %p159 = por %p157, %p158
      %p160 = scmp.le.s32.totalorder 1, %s16
      %p161 = scmp.lt.s32.totalorder %s16, 3
      %p162 = pnand %p160, %p161
      %p163 = pneg %p162
      // Predicated region
      $region9: #{tpu_custom_call.1} parent=5 // pred_check
        _
      $region10: #{tpu_custom_call.1} parent=5 // pred_check_branch
        %165 = sbr.rel (%p162) target = $region12
      $region11: #{tpu_custom_call.1} parent=5 // pred_region
        %s166 = ssub.s32 %s16, 1
        // Predicated region
        $region13: #{tpu_custom_call.1} parent=11 // pred_check
          %p167 = pneg %p37
        $region14: #{tpu_custom_call.1} parent=11 // pred_check_branch
          %169 = sbr.rel (%p167) target = $region16
        $region15: #{tpu_custom_call.1} parent=11 // pred_region
          _
        $region16: #{tpu_custom_call.1} parent=11 // pred_fallthru
          _
        // Predicated region
        $region17: #{tpu_custom_call.1} parent=11 // pred_check
          %p170 = pneg %p58
        $region18: #{tpu_custom_call.1} parent=11 // pred_check_branch
          %172 = sbr.rel (%p170) target = $region20
        $region19: #{tpu_custom_call.1} parent=11 // pred_region
          _
        $region20: #{tpu_custom_call.1} parent=11 // pred_fallthru
          _
        // Predicated region
        $region21: #{tpu_custom_call.1} parent=11 // pred_check
          %p173 = pneg %p79
        $region22: #{tpu_custom_call.1} parent=11 // pred_check_branch
          %175 = sbr.rel (%p173) target = $region24
        $region23: #{tpu_custom_call.1} parent=11 // pred_region
          %s177 = ssub.s32 16384, 16384
          %178 = vsyncadd [#allocation3], %s177
          %s179 = sshll.u32 [#allocation2], 4
          %s180 = int_to_ptr.vmem [resolvable:$true] %s179
          %185 = dma.hbm_to_vmem [thread:$0]  %s2, 16384, %s180, [#allocation3], 512, 512, 32
        $region24: #{tpu_custom_call.1} parent=11 // pred_fallthru
          _
        // Predicated region
        $region25: #{tpu_custom_call.1} parent=11 // pred_check
          %p186 = pneg %p100
        $region26: #{tpu_custom_call.1} parent=11 // pred_check_branch
          %188 = sbr.rel (%p186) target = $region28
        $region27: #{tpu_custom_call.1} parent=11 // pred_region
          %s190 = ssub.s32 16384, 16384
          %191 = vsyncadd [#allocation6], %s190
          %s192 = sshll.u32 [#allocation5], 4
          %s193 = int_to_ptr.vmem [resolvable:$true] %s192
          %198 = dma.hbm_to_vmem [thread:$0]  %s3, 16384, %s193, [#allocation6], 256, 256, 16
        $region28: #{tpu_custom_call.1} parent=11 // pred_fallthru
          _
      $region12: #{tpu_custom_call.1} parent=5 // pred_fallthru
        _
      %p199 = scmp.lt.s32.totalorder %s16, 2
      // Predicated region
      $region29: #{tpu_custom_call.1} parent=5 // pred_check
        %p200 = pneg %p199
      $region30: #{tpu_custom_call.1} parent=5 // pred_check_branch
        %202 = sbr.rel (%p200) target = $region32
      $region31: #{tpu_custom_call.1} parent=5 // pred_region
        // Predicated region
        $region33: #{tpu_custom_call.1} parent=31 // pred_check
          %p203 = pneg %p120
        $region34: #{tpu_custom_call.1} parent=31 // pred_check_branch
          %205 = sbr.rel (%p203) target = $region36
        $region35: #{tpu_custom_call.1} parent=31 // pred_region
          %p206 = scmp.lt.s32.totalorder %s16, 1
          %s207 = scalar_select %p206, %s16, 1
          %s208 = smul.addr %s207, 2
          %s209 = smul.addr %s208, 4
          %s210 = scalar_lea.vmem %s4, %s209
        $region36: #{tpu_custom_call.1} parent=31 // pred_fallthru
          _
      $region32: #{tpu_custom_call.1} parent=5 // pred_fallthru
        _
      %p211 = scmp.le.s32.totalorder 1, %s16
      %p212 = scmp.lt.s32.totalorder %s16, 3
      %p213 = pnand %p211, %p212
      %p214 = pneg %p213
      // Predicated region
      $region37: #{tpu_custom_call.1} parent=5 // pred_check
        _
      $region38: #{tpu_custom_call.1} parent=5 // pred_check_branch
        %216 = sbr.rel (%p213) target = $region40
      $region39: #{tpu_custom_call.1} parent=5 // pred_region
        %s217 = ssub.s32 %s16, 1
        // Predicated region
        $region41: #{tpu_custom_call.1} parent=39 // pred_check
          %p218 = pneg %p79
        $region42: #{tpu_custom_call.1} parent=39 // pred_check_branch
          %220 = sbr.rel (%p218) target = $region44
        $region43: #{tpu_custom_call.1} parent=39 // pred_region
          %221 = dma.done [#allocation3], 16384
        $region44: #{tpu_custom_call.1} parent=39 // pred_fallthru
          _
        // Predicated region
        $region45: #{tpu_custom_call.1} parent=39 // pred_check
          %p222 = pneg %p100
        $region46: #{tpu_custom_call.1} parent=39 // pred_check_branch
          %224 = sbr.rel (%p222) target = $region48
        $region47: #{tpu_custom_call.1} parent=39 // pred_region
          %225 = dma.done [#allocation6], 16384
        $region48: #{tpu_custom_call.1} parent=39 // pred_fallthru
          _
        %p226 = pneg %p37
        %p227 = pneg %p34
        %p228 = pneg %p58
        %p229 = pneg %p55
        %p230 = pneg %p79
        %p231 = pneg %p76
        %p232 = pneg %p100
        %p233 = pneg %p97
        %p234 = scmp.lt.s32.totalorder %s21, 1
        %s235 = scalar_select %p234, %s21, 1
        %s236 = smul.addr %s235, 2
        %s237 = smul.addr %s236, 4
        %s238 = scalar_lea.vmem %s4, %s237
        %p239 = pneg %p126
        %p240 = pneg %p123
        %p241 = pneg %p152
        %p242 = pneg %p149
        %s243 = sand.u32 %s139, 1
        %s244 = scalar_lea.sflag [#allocation4], %s243
        %s245 = sand.u32 %s139, 1
        %s246 = smul.addr %s245, 16
        %s247 = scalar_lea.vmem [#allocation7], %s246
        %p248 = scmp.lt.s32.totalorder %s21, 1
        %s249 = scalar_select %p248, %s21, 1
        %s250 = smul.addr %s249, 2
        %s251 = smul.addr %s250, 4
        %s252 = scalar_lea.vmem %s4, %s251
        %v253 = vld [vmem:[%s252] sm:$0xff]
        %v255 = vcombine.high %v253, %v253
        %257 = vst [vmem:[%s247] sm:$0xf] %v253
        %258 = vst [vmem:[%s247 + $0x8] sm:$0xf] %v255
        %v259 = vld [vmem:[#allocation2] sm:$0xff]
        %v260 = vld [vmem:[#allocation2 + $0x8] sm:$0xff]
        %v261 = vld [vmem:[#allocation2 + $0x10] sm:$0xff]
        %v262 = vld [vmem:[#allocation2 + $0x18] sm:$0xff]
        %v263 = vld [vmem:[#allocation2 + $0x20] sm:$0xff]
        %v264 = vld [vmem:[#allocation2 + $0x28] sm:$0xff]
        %v265 = vld [vmem:[#allocation2 + $0x30] sm:$0xff]
        %v266 = vld [vmem:[#allocation2 + $0x38] sm:$0xff]
        %v267 = vld [vmem:[#allocation2 + $0x40] sm:$0xff]
        %v268 = vld [vmem:[#allocation2 + $0x48] sm:$0xff]
        %v269 = vld [vmem:[#allocation2 + $0x50] sm:$0xff]
        %v270 = vld [vmem:[#allocation2 + $0x58] sm:$0xff]
        %v271 = vld [vmem:[#allocation2 + $0x60] sm:$0xff]
        %v272 = vld [vmem:[#allocation2 + $0x68] sm:$0xff]
        %v273 = vld [vmem:[#allocation2 + $0x70] sm:$0xff]
        %v274 = vld [vmem:[#allocation2 + $0x78] sm:$0xff]
        %v275 = vld [vmem:[#allocation2 + $0x80] sm:$0xff]
        %v276 = vld [vmem:[#allocation2 + $0x88] sm:$0xff]
        %v277 = vld [vmem:[#allocation2 + $0x90] sm:$0xff]
        %v278 = vld [vmem:[#allocation2 + $0x98] sm:$0xff]
        %v279 = vld [vmem:[#allocation2 + $0xa0] sm:$0xff]
        %v280 = vld [vmem:[#allocation2 + $0xa8] sm:$0xff]
        %v281 = vld [vmem:[#allocation2 + $0xb0] sm:$0xff]
        %v282 = vld [vmem:[#allocation2 + $0xb8] sm:$0xff]
        %v283 = vld [vmem:[#allocation2 + $0xc0] sm:$0xff]
        %v284 = vld [vmem:[#allocation2 + $0xc8] sm:$0xff]
        %v285 = vld [vmem:[#allocation2 + $0xd0] sm:$0xff]
        %v286 = vld [vmem:[#allocation2 + $0xd8] sm:$0xff]
        %v287 = vld [vmem:[#allocation2 + $0xe0] sm:$0xff]
        %v288 = vld [vmem:[#allocation2 + $0xe8] sm:$0xff]
        %v289 = vld [vmem:[#allocation2 + $0xf0] sm:$0xff]
        %v290 = vld [vmem:[#allocation2 + $0xf8] sm:$0xff]
        %v291 = vld [vmem:[#allocation2 + $0x100] sm:$0xff]
        %v292 = vld [vmem:[#allocation2 + $0x108] sm:$0xff]
        %v293 = vld [vmem:[#allocation2 + $0x110] sm:$0xff]
        %v294 = vld [vmem:[#allocation2 + $0x118] sm:$0xff]
        %v295 = vld [vmem:[#allocation2 + $0x120] sm:$0xff]
        %v296 = vld [vmem:[#allocation2 + $0x128] sm:$0xff]
        %v297 = vld [vmem:[#allocation2 + $0x130] sm:$0xff]
        %v298 = vld [vmem:[#allocation2 + $0x138] sm:$0xff]
        %v299 = vld [vmem:[#allocation2 + $0x140] sm:$0xff]
        %v300 = vld [vmem:[#allocation2 + $0x148] sm:$0xff]
        %v301 = vld [vmem:[#allocation2 + $0x150] sm:$0xff]
        %v302 = vld [vmem:[#allocation2 + $0x158] sm:$0xff]
        %v303 = vld [vmem:[#allocation2 + $0x160] sm:$0xff]
        %v304 = vld [vmem:[#allocation2 + $0x168] sm:$0xff]
        %v305 = vld [vmem:[#allocation2 + $0x170] sm:$0xff]
        %v306 = vld [vmem:[#allocation2 + $0x178] sm:$0xff]
        %v307 = vld [vmem:[#allocation2 + $0x180] sm:$0xff]
        %v308 = vld [vmem:[#allocation2 + $0x188] sm:$0xff]
        %v309 = vld [vmem:[#allocation2 + $0x190] sm:$0xff]
        %v310 = vld [vmem:[#allocation2 + $0x198] sm:$0xff]
        %v311 = vld [vmem:[#allocation2 + $0x1a0] sm:$0xff]
        %v312 = vld [vmem:[#allocation2 + $0x1a8] sm:$0xff]
        %v313 = vld [vmem:[#allocation2 + $0x1b0] sm:$0xff]
        %v314 = vld [vmem:[#allocation2 + $0x1b8] sm:$0xff]
        %v315 = vld [vmem:[#allocation2 + $0x1c0] sm:$0xff]
        %v316 = vld [vmem:[#allocation2 + $0x1c8] sm:$0xff]
        %v317 = vld [vmem:[#allocation2 + $0x1d0] sm:$0xff]
        %v318 = vld [vmem:[#allocation2 + $0x1d8] sm:$0xff]
        %v319 = vld [vmem:[#allocation2 + $0x1e0] sm:$0xff]
        %v320 = vld [vmem:[#allocation2 + $0x1e8] sm:$0xff]
        %v321 = vld [vmem:[#allocation2 + $0x1f0] sm:$0xff]
        %v322 = vld [vmem:[#allocation2 + $0x1f8] sm:$0xff]
        %v323 = vld [vmem:[#allocation2 + $0x200] sm:$0xff]
        %v324 = vld [vmem:[#allocation2 + $0x208] sm:$0xff]
        %v325 = vld [vmem:[#allocation2 + $0x210] sm:$0xff]
        %v326 = vld [vmem:[#allocation2 + $0x218] sm:$0xff]
        %v327 = vld [vmem:[#allocation2 + $0x220] sm:$0xff]
        %v328 = vld [vmem:[#allocation2 + $0x228] sm:$0xff]
        %v329 = vld [vmem:[#allocation2 + $0x230] sm:$0xff]
        %v330 = vld [vmem:[#allocation2 + $0x238] sm:$0xff]
        %v331 = vld [vmem:[#allocation2 + $0x240] sm:$0xff]
        %v332 = vld [vmem:[#allocation2 + $0x248] sm:$0xff]
        %v333 = vld [vmem:[#allocation2 + $0x250] sm:$0xff]
        %v334 = vld [vmem:[#allocation2 + $0x258] sm:$0xff]
        %v335 = vld [vmem:[#allocation2 + $0x260] sm:$0xff]
        %v336 = vld [vmem:[#allocation2 + $0x268] sm:$0xff]
        %v337 = vld [vmem:[#allocation2 + $0x270] sm:$0xff]
        %v338 = vld [vmem:[#allocation2 + $0x278] sm:$0xff]
        %v339 = vld [vmem:[#allocation2 + $0x280] sm:$0xff]
        %v340 = vld [vmem:[#allocation2 + $0x288] sm:$0xff]
        %v341 = vld [vmem:[#allocation2 + $0x290] sm:$0xff]
        %v342 = vld [vmem:[#allocation2 + $0x298] sm:$0xff]
        %v343 = vld [vmem:[#allocation2 + $0x2a0] sm:$0xff]
        %v344 = vld [vmem:[#allocation2 + $0x2a8] sm:$0xff]
        %v345 = vld [vmem:[#allocation2 + $0x2b0] sm:$0xff]
        %v346 = vld [vmem:[#allocation2 + $0x2b8] sm:$0xff]
        %v347 = vld [vmem:[#allocation2 + $0x2c0] sm:$0xff]
        %v348 = vld [vmem:[#allocation2 + $0x2c8] sm:$0xff]
        %v349 = vld [vmem:[#allocation2 + $0x2d0] sm:$0xff]
        %v350 = vld [vmem:[#allocation2 + $0x2d8] sm:$0xff]
        %v351 = vld [vmem:[#allocation2 + $0x2e0] sm:$0xff]
        %v352 = vld [vmem:[#allocation2 + $0x2e8] sm:$0xff]
        %v353 = vld [vmem:[#allocation2 + $0x2f0] sm:$0xff]
        %v354 = vld [vmem:[#allocation2 + $0x2f8] sm:$0xff]
        %v355 = vld [vmem:[#allocation2 + $0x300] sm:$0xff]
        %v356 = vld [vmem:[#allocation2 + $0x308] sm:$0xff]
        %v357 = vld [vmem:[#allocation2 + $0x310] sm:$0xff]
        %v358 = vld [vmem:[#allocation2 + $0x318] sm:$0xff]
        %v359 = vld [vmem:[#allocation2 + $0x320] sm:$0xff]
        %v360 = vld [vmem:[#allocation2 + $0x328] sm:$0xff]
        %v361 = vld [vmem:[#allocation2 + $0x330] sm:$0xff]
        %v362 = vld [vmem:[#allocation2 + $0x338] sm:$0xff]
        %v363 = vld [vmem:[#allocation2 + $0x340] sm:$0xff]
        %v364 = vld [vmem:[#allocation2 + $0x348] sm:$0xff]
        %v365 = vld [vmem:[#allocation2 + $0x350] sm:$0xff]
        %v366 = vld [vmem:[#allocation2 + $0x358] sm:$0xff]
        %v367 = vld [vmem:[#allocation2 + $0x360] sm:$0xff]
        %v368 = vld [vmem:[#allocation2 + $0x368] sm:$0xff]
        %v369 = vld [vmem:[#allocation2 + $0x370] sm:$0xff]
        %v370 = vld [vmem:[#allocation2 + $0x378] sm:$0xff]
        %v371 = vld [vmem:[#allocation2 + $0x380] sm:$0xff]
        %v372 = vld [vmem:[#allocation2 + $0x388] sm:$0xff]
        %v373 = vld [vmem:[#allocation2 + $0x390] sm:$0xff]
        %v374 = vld [vmem:[#allocation2 + $0x398] sm:$0xff]
        %v375 = vld [vmem:[#allocation2 + $0x3a0] sm:$0xff]
        %v376 = vld [vmem:[#allocation2 + $0x3a8] sm:$0xff]
        %v377 = vld [vmem:[#allocation2 + $0x3b0] sm:$0xff]
        %v378 = vld [vmem:[#allocation2 + $0x3b8] sm:$0xff]
        %v379 = vld [vmem:[#allocation2 + $0x3c0] sm:$0xff]
        %v380 = vld [vmem:[#allocation2 + $0x3c8] sm:$0xff]
        %v381 = vld [vmem:[#allocation2 + $0x3d0] sm:$0xff]
        %v382 = vld [vmem:[#allocation2 + $0x3d8] sm:$0xff]
        %v383 = vld [vmem:[#allocation2 + $0x3e0] sm:$0xff]
        %v384 = vld [vmem:[#allocation2 + $0x3e8] sm:$0xff]
        %v385 = vld [vmem:[#allocation2 + $0x3f0] sm:$0xff]
        %v386 = vld [vmem:[#allocation2 + $0x3f8] sm:$0xff]
        %387 = vmatprep.subr.mxu0 %v260
        %388 = vmatpush1.msra.mxu0 %v259
        %389 = vmatprep.subr.mxu0 %v264
        %390 = vmatpush1.msra.mxu0 %v263
        %391 = vmatprep.subr.mxu0 %v268
        %392 = vmatpush1.msra.mxu0 %v267
        %393 = vmatprep.subr.mxu0 %v272
        %394 = vmatpush1.msra.mxu0 %v271
        %395 = vmatprep.subr.mxu0 %v276
        %396 = vmatpush1.msra.mxu0 %v275
        %397 = vmatprep.subr.mxu0 %v280
        %398 = vmatpush1.msra.mxu0 %v279
        %399 = vmatprep.subr.mxu0 %v284
        %400 = vmatpush1.msra.mxu0 %v283
        %401 = vmatprep.subr.mxu0 %v288
        %402 = vmatpush1.msra.mxu0 %v287
        %403 = vmatprep.subr.mxu0 %v292
        %404 = vmatpush1.msra.mxu0 %v291
        %405 = vmatprep.subr.mxu0 %v296
        %406 = vmatpush1.msra.mxu0 %v295
        %407 = vmatprep.subr.mxu0 %v300
        %408 = vmatpush1.msra.mxu0 %v299
        %409 = vmatprep.subr.mxu0 %v304
        %410 = vmatpush1.msra.mxu0 %v303
        %411 = vmatprep.subr.mxu0 %v308
        %412 = vmatpush1.msra.mxu0 %v307
        %413 = vmatprep.subr.mxu0 %v312
        %414 = vmatpush1.msra.mxu0 %v311
        %415 = vmatprep.subr.mxu0 %v316
        %416 = vmatpush1.msra.mxu0 %v315
        %417 = vmatprep.subr.mxu0 %v320
        %418 = vmatpush1.msra.mxu0 %v319
        %419 = vmatprep.subr.mxu0 %v324
        %420 = vmatpush1.msra.mxu0 %v323
        %421 = vmatprep.subr.mxu0 %v328
        %422 = vmatpush1.msra.mxu0 %v327
        %423 = vmatprep.subr.mxu0 %v332
        %424 = vmatpush1.msra.mxu0 %v331
        %425 = vmatprep.subr.mxu0 %v336
        %426 = vmatpush1.msra.mxu0 %v335
        %427 = vmatprep.subr.mxu0 %v340
        %428 = vmatpush1.msra.mxu0 %v339
        %429 = vmatprep.subr.mxu0 %v344
        %430 = vmatpush1.msra.mxu0 %v343
        %431 = vmatprep.subr.mxu0 %v348
        %432 = vmatpush1.msra.mxu0 %v347
        %433 = vmatprep.subr.mxu0 %v352
        %434 = vmatpush1.msra.mxu0 %v351
        %435 = vmatprep.subr.mxu0 %v356
        %436 = vmatpush1.msra.mxu0 %v355
        %437 = vmatprep.subr.mxu0 %v360
        %438 = vmatpush1.msra.mxu0 %v359
        %439 = vmatprep.subr.mxu0 %v364
        %440 = vmatpush1.msra.mxu0 %v363
        %441 = vmatprep.subr.mxu0 %v368
        %442 = vmatpush1.msra.mxu0 %v367
        %443 = vmatprep.subr.mxu0 %v372
        %444 = vmatpush1.msra.mxu0 %v371
        %445 = vmatprep.subr.mxu0 %v376
        %446 = vmatpush1.msra.mxu0 %v375
        %447 = vmatprep.subr.mxu0 %v380
        %448 = vmatpush1.msra.mxu0 %v379
        %449 = vmatprep.subr.mxu0 %v384
        %450 = vmatpush1.msra.mxu0 %v383
        %451 = vmatprep.mubr.f32.mxu0 %v255
        %452 = vmatmul.mubr.f32.gmra.mrb[0].mxu0 %v253
        %v453 = vpop.f32.mrb[0].mxu0
        %v454 = vadd.f32 0.0, %v453
        %v455 = vpop.f32.mrb[0].mxu0
        %v456 = vadd.f32 0.0, %v455
        %457 = vdwg.mxu0
        %458 = vmatprep.subr.mxu0 %v262
        %459 = vmatpush1.msra.mxu0 %v261
        %460 = vmatprep.subr.mxu0 %v266
        %461 = vmatpush1.msra.mxu0 %v265
        %462 = vmatprep.subr.mxu0 %v270
        %463 = vmatpush1.msra.mxu0 %v269
        %464 = vmatprep.subr.mxu0 %v274
        %465 = vmatpush1.msra.mxu0 %v273
        %466 = vmatprep.subr.mxu0 %v278
        %467 = vmatpush1.msra.mxu0 %v277
        %468 = vmatprep.subr.mxu0 %v282
        %469 = vmatpush1.msra.mxu0 %v281
        %470 = vmatprep.subr.mxu0 %v286
        %471 = vmatpush1.msra.mxu0 %v285
        %472 = vmatprep.subr.mxu0 %v290
        %473 = vmatpush1.msra.mxu0 %v289
        %474 = vmatprep.subr.mxu0 %v294
        %475 = vmatpush1.msra.mxu0 %v293
        %476 = vmatprep.subr.mxu0 %v298
        %477 = vmatpush1.msra.mxu0 %v297
        %478 = vmatprep.subr.mxu0 %v302
        %479 = vmatpush1.msra.mxu0 %v301
        %480 = vmatprep.subr.mxu0 %v306
        %481 = vmatpush1.msra.mxu0 %v305
        %482 = vmatprep.subr.mxu0 %v310
        %483 = vmatpush1.msra.mxu0 %v309
        %484 = vmatprep.subr.mxu0 %v314
        %485 = vmatpush1.msra.mxu0 %v313
        %486 = vmatprep.subr.mxu0 %v318
        %487 = vmatpush1.msra.mxu0 %v317
        %488 = vmatprep.subr.mxu0 %v322
        %489 = vmatpush1.msra.mxu0 %v321
        %490 = vmatprep.subr.mxu0 %v326
        %491 = vmatpush1.msra.mxu0 %v325
        %492 = vmatprep.subr.mxu0 %v330
        %493 = vmatpush1.msra.mxu0 %v329
        %494 = vmatprep.subr.mxu0 %v334
        %495 = vmatpush1.msra.mxu0 %v333
        %496 = vmatprep.subr.mxu0 %v338
        %497 = vmatpush1.msra.mxu0 %v337
        %498 = vmatprep.subr.mxu0 %v342
        %499 = vmatpush1.msra.mxu0 %v341
        %500 = vmatprep.subr.mxu0 %v346
        %501 = vmatpush1.msra.mxu0 %v345
        %502 = vmatprep.subr.mxu0 %v350
        %503 = vmatpush1.msra.mxu0 %v349
        %504 = vmatprep.subr.mxu0 %v354
        %505 = vmatpush1.msra.mxu0 %v353
        %506 = vmatprep.subr.mxu0 %v358
        %507 = vmatpush1.msra.mxu0 %v357
        %508 = vmatprep.subr.mxu0 %v362
        %509 = vmatpush1.msra.mxu0 %v361
        %510 = vmatprep.subr.mxu0 %v366
        %511 = vmatpush1.msra.mxu0 %v365
        %512 = vmatprep.subr.mxu0 %v370
        %513 = vmatpush1.msra.mxu0 %v369
        %514 = vmatprep.subr.mxu0 %v374
        %515 = vmatpush1.msra.mxu0 %v373
        %516 = vmatprep.subr.mxu0 %v378
        %517 = vmatpush1.msra.mxu0 %v377
        %518 = vmatprep.subr.mxu0 %v382
        %519 = vmatpush1.msra.mxu0 %v381
        %520 = vmatprep.subr.mxu0 %v386
        %521 = vmatpush1.msra.mxu0 %v385
        %522 = vmatprep.mubr.f32.mxu0 %v255
        %523 = vmatmul.mubr.f32.gmra.mrb[0].mxu0 %v253
        %v524 = vpop.f32.mrb[0].mxu0
        %v525 = vadd.f32 0.0, %v524
        %v526 = vpop.f32.mrb[0].mxu0
        %v527 = vadd.f32 0.0, %v526
        %528 = vdwg.mxu0
        %v529 = vld [vmem:[%s0] sm:$0x1]
        %vm530 = vcmask 31744
        %v532 = vsel %vm530, %v529, 0
        %vm534 = vcmask 1043456
        %v536 = vsel %vm534, %v454, 0
        %538 = vmatprep.subr.mxu0 0.0
        %539 = vmatpush1.msra.mxu0 %v536
        %540 = vmatprep.subr.mxu0 0.0
        %541 = vmatpush1.msra.mxu0 0.0
        %542 = vmatprep.subr.mxu0 0.0
        %543 = vmatpush1.msra.mxu0 0.0
        %544 = vmatprep.subr.mxu0 0.0
        %545 = vmatpush1.msra.mxu0 0.0
        %546 = vmatprep.subr.mxu0 0.0
        %547 = vmatpush1.msra.mxu0 0.0
        %548 = vmatprep.subr.mxu0 0.0
        %549 = vmatpush1.msra.mxu0 0.0
        %550 = vmatprep.subr.mxu0 0.0
        %551 = vmatpush1.msra.mxu0 0.0
        %552 = vmatprep.subr.mxu0 0.0
        %553 = vmatpush1.msra.mxu0 0.0
        %554 = vmatprep.subr.mxu0 0.0
        %555 = vmatpush1.msra.mxu0 0.0
        %556 = vmatprep.subr.mxu0 0.0
        %557 = vmatpush1.msra.mxu0 0.0
        %558 = vmatprep.subr.mxu0 0.0
        %559 = vmatpush1.msra.mxu0 0.0
        %560 = vmatprep.subr.mxu0 0.0
        %561 = vmatpush1.msra.mxu0 0.0
        %562 = vmatprep.subr.mxu0 0.0
        %563 = vmatpush1.msra.mxu0 0.0
        %564 = vmatprep.subr.mxu0 0.0
        %565 = vmatpush1.msra.mxu0 0.0
        %566 = vmatprep.subr.mxu0 0.0
        %567 = vmatpush1.msra.mxu0 0.0
        %568 = vmatprep.subr.mxu0 0.0
        %569 = vmatpush1.msra.mxu0 0.0
        %570 = vmatprep.subr.mxu0 0.0
        %571 = vmatpush1.msra.mxu0 0.0
        %572 = vmatprep.subr.mxu0 0.0
        %573 = vmatpush1.msra.mxu0 0.0
        %574 = vmatprep.subr.mxu0 0.0
        %575 = vmatpush1.msra.mxu0 0.0
        %576 = vmatprep.subr.mxu0 0.0
        %577 = vmatpush1.msra.mxu0 0.0
        %578 = vmatprep.subr.mxu0 0.0
        %579 = vmatpush1.msra.mxu0 0.0
        %580 = vmatprep.subr.mxu0 0.0
        %581 = vmatpush1.msra.mxu0 0.0
        %582 = vmatprep.subr.mxu0 0.0
        %583 = vmatpush1.msra.mxu0 0.0
        %584 = vmatprep.subr.mxu0 0.0
        %585 = vmatpush1.msra.mxu0 0.0
        %586 = vmatprep.subr.mxu0 0.0
        %587 = vmatpush1.msra.mxu0 0.0
        %588 = vmatprep.subr.mxu0 0.0
        %589 = vmatpush1.msra.mxu0 0.0
        %590 = vmatprep.subr.mxu0 0.0
        %591 = vmatpush1.msra.mxu0 0.0
        %592 = vmatprep.subr.mxu0 0.0
        %593 = vmatpush1.msra.mxu0 0.0
        %594 = vmatprep.subr.mxu0 0.0
        %595 = vmatpush1.msra.mxu0 0.0
        %596 = vmatprep.subr.mxu0 0.0
        %597 = vmatpush1.msra.mxu0 0.0
        %598 = vmatprep.subr.mxu0 0.0
        %599 = vmatpush1.msra.mxu0 0.0
        %600 = vmatprep.subr.mxu0 0.0
        %601 = vmatpush1.msra.mxu0 0.0
        %602 = vmatprep.mubr.f32.mxu0 0.0
        %603 = vmatmul.mubr.f32.gmra.mrb[0].mxu0 %v532
        %v604 = vpop.f32.mrb[0].mxu0
        %v605 = vadd.f32 0.0, %v604
        %v606 = vpop.f32.mrb[0].mxu0
        %607 = vdwg.mxu0
        %v608 = vld [vmem:[#allocation5] sm:$0xff]
        %v609 = vld [vmem:[#allocation5 + $0x8] sm:$0xff]
        %v610 = vld [vmem:[#allocation5 + $0x10] sm:$0xff]
        %v611 = vld [vmem:[#allocation5 + $0x18] sm:$0xff]
        %v612 = vld [vmem:[#allocation5 + $0x20] sm:$0xff]
        %v613 = vld [vmem:[#allocation5 + $0x28] sm:$0xff]
        %v614 = vld [vmem:[#allocation5 + $0x30] sm:$0xff]
        %v615 = vld [vmem:[#allocation5 + $0x38] sm:$0xff]
        %v616 = vld [vmem:[#allocation5 + $0x40] sm:$0xff]
        %v617 = vld [vmem:[#allocation5 + $0x48] sm:$0xff]
        %v618 = vld [vmem:[#allocation5 + $0x50] sm:$0xff]
        %v619 = vld [vmem:[#allocation5 + $0x58] sm:$0xff]
        %v620 = vld [vmem:[#allocation5 + $0x60] sm:$0xff]
        %v621 = vld [vmem:[#allocation5 + $0x68] sm:$0xff]
        %v622 = vld [vmem:[#allocation5 + $0x70] sm:$0xff]
        %v623 = vld [vmem:[#allocation5 + $0x78] sm:$0xff]
        %v624 = vld [vmem:[#allocation5 + $0x80] sm:$0xff]
        %v625 = vld [vmem:[#allocation5 + $0x88] sm:$0xff]
        %v626 = vld [vmem:[#allocation5 + $0x90] sm:$0xff]
        %v627 = vld [vmem:[#allocation5 + $0x98] sm:$0xff]
        %v628 = vld [vmem:[#allocation5 + $0xa0] sm:$0xff]
        %v629 = vld [vmem:[#allocation5 + $0xa8] sm:$0xff]
        %v630 = vld [vmem:[#allocation5 + $0xb0] sm:$0xff]
        %v631 = vld [vmem:[#allocation5 + $0xb8] sm:$0xff]
        %v632 = vld [vmem:[#allocation5 + $0xc0] sm:$0xff]
        %v633 = vld [vmem:[#allocation5 + $0xc8] sm:$0xff]
        %v634 = vld [vmem:[#allocation5 + $0xd0] sm:$0xff]
        %v635 = vld [vmem:[#allocation5 + $0xd8] sm:$0xff]
        %v636 = vld [vmem:[#allocation5 + $0xe0] sm:$0xff]
        %v637 = vld [vmem:[#allocation5 + $0xe8] sm:$0xff]
        %v638 = vld [vmem:[#allocation5 + $0xf0] sm:$0xff]
        %v639 = vld [vmem:[#allocation5 + $0xf8] sm:$0xff]
        %v640 = vld [vmem:[%s1] sm:$0x1]
        %642 = vset.pattern.permute.xlu0 0
        %643 = vperm.xlu0 %642, %v640
        %v644 = vpop.permute.xlu0 %643
        %v646 = vlaneseq
        %v647 = vshrl.u32 %v646, 7
        %v648 = vsub.s32 0, %v647
        %v649 = vrot.slane %v644, %v648
        %650 = vmatprep.subr.mxu0 %v609
        %651 = vmatpush1.msra.mxu0 %v608
        %652 = vmatprep.subr.mxu0 %v611
        %653 = vmatpush1.msra.mxu0 %v610
        %654 = vmatprep.subr.mxu0 %v613
        %655 = vmatpush1.msra.mxu0 %v612
        %656 = vmatprep.subr.mxu0 %v615
        %657 = vmatpush1.msra.mxu0 %v614
        %658 = vmatprep.subr.mxu0 %v617
        %659 = vmatpush1.msra.mxu0 %v616
        %660 = vmatprep.subr.mxu0 %v619
        %661 = vmatpush1.msra.mxu0 %v618
        %662 = vmatprep.subr.mxu0 %v621
        %663 = vmatpush1.msra.mxu0 %v620
        %664 = vmatprep.subr.mxu0 %v623
        %665 = vmatpush1.msra.mxu0 %v622
        %666 = vmatprep.subr.mxu0 %v625
        %667 = vmatpush1.msra.mxu0 %v624
        %668 = vmatprep.subr.mxu0 %v627
        %669 = vmatpush1.msra.mxu0 %v626
        %670 = vmatprep.subr.mxu0 %v629
        %671 = vmatpush1.msra.mxu0 %v628
        %672 = vmatprep.subr.mxu0 %v631
        %673 = vmatpush1.msra.mxu0 %v630
        %674 = vmatprep.subr.mxu0 %v633
        %675 = vmatpush1.msra.mxu0 %v632
        %676 = vmatprep.subr.mxu0 %v635
        %677 = vmatpush1.msra.mxu0 %v634
        %678 = vmatprep.subr.mxu0 %v637
        %679 = vmatpush1.msra.mxu0 %v636
        %680 = vmatprep.subr.mxu0 %v639
        %681 = vmatpush1.msra.mxu0 %v638
        %682 = vmatprep.subr.mxu0 0.0
        %683 = vmatpush1.msra.mxu0 0.0
        %684 = vmatprep.subr.mxu0 0.0
        %685 = vmatpush1.msra.mxu0 0.0
        %686 = vmatprep.subr.mxu0 0.0
        %687 = vmatpush1.msra.mxu0 0.0
        %688 = vmatprep.subr.mxu0 0.0
        %689 = vmatpush1.msra.mxu0 0.0
        %690 = vmatprep.subr.mxu0 0.0
        %691 = vmatpush1.msra.mxu0 0.0
        %692 = vmatprep.subr.mxu0 0.0
        %693 = vmatpush1.msra.mxu0 0.0
        %694 = vmatprep.subr.mxu0 0.0
        %695 = vmatpush1.msra.mxu0 0.0
        %696 = vmatprep.subr.mxu0 0.0
        %697 = vmatpush1.msra.mxu0 0.0
        %698 = vmatprep.subr.mxu0 0.0
        %699 = vmatpush1.msra.mxu0 0.0
        %700 = vmatprep.subr.mxu0 0.0
        %701 = vmatpush1.msra.mxu0 0.0
        %702 = vmatprep.subr.mxu0 0.0
        %703 = vmatpush1.msra.mxu0 0.0
        %704 = vmatprep.subr.mxu0 0.0
        %705 = vmatpush1.msra.mxu0 0.0
        %706 = vmatprep.subr.mxu0 0.0
        %707 = vmatpush1.msra.mxu0 0.0
        %708 = vmatprep.subr.mxu0 0.0
        %709 = vmatpush1.msra.mxu0 0.0
        %710 = vmatprep.subr.mxu0 0.0
        %711 = vmatpush1.msra.mxu0 0.0
        %712 = vmatprep.subr.mxu0 0.0
        %713 = vmatpush1.msra.mxu0 0.0
        %714 = vmatprep.mubr.f32.mxu0 0.0
        %715 = vmatmul.mubr.f32.gmra.mrb[0].mxu0 %v605
        %v716 = vpop.f32.mrb[0].mxu0
        %v717 = vadd.f32 %v649, %v716
        %v718 = vpop.f32.mrb[0].mxu0
        %v719 = vadd.f32 %v649, %v718
        %720 = vdwg.mxu0
        %v723 = vcombine.low %v717, %v719
        %v725 = vunpack.c.l.s4 1966171168
        %v726 = vunpack.c.0.s8 %v725
        %v727 = vlaneseq
        %v728 = vshrl.u32 %v727, 7
        %v729 = vsub.s32 %v726, %v728
        %v730 = vrot.slane %v723, %v729
        %v732 = vunpack.c.l.s4 1966171168
        %v733 = vunpack.c.0.s8 %v732
        %v734 = vlaneseq
        %v735 = vshrl.u32 %v734, 7
        %v736 = vsub.s32 %v733, %v735
        %v737 = vrot.slane %v730, %v736
        %v739 = vlaneseq
        %vm740 = vcmp.ge.s32.totalorder %v739, 0
        %vm741 = vcmp.lt.s32.totalorder %v739, 256
        %vm742 = vmand %vm740, %vm741
        %s743 = scalar_lea.vmem %s247, 4 [#allocation7]
        %744 = vst.msk [vmem:[%s743] ss:$8 sm:$0x3] %vm742, %v737
        %745 = vst.msk [vmem:[%s743] ss:$8 sm:$0x0] %vm742, %v737
        %s746 = scalar_lea.vmem %s0, 1
        %v747 = vld [vmem:[%s746] sm:$0x1]
        %v749 = vsel %vm530, %v747, 0
        %v752 = vsel %vm534, %v456, 0
        %754 = vmatprep.subr.mxu0 0.0
        %755 = vmatpush1.msra.mxu0 %v752
        %756 = vmatprep.subr.mxu0 0.0
        %757 = vmatpush1.msra.mxu0 0.0
        %758 = vmatprep.subr.mxu0 0.0
        %759 = vmatpush1.msra.mxu0 0.0
        %760 = vmatprep.subr.mxu0 0.0
        %761 = vmatpush1.msra.mxu0 0.0
        %762 = vmatprep.subr.mxu0 0.0
        %763 = vmatpush1.msra.mxu0 0.0
        %764 = vmatprep.subr.mxu0 0.0
        %765 = vmatpush1.msra.mxu0 0.0
        %766 = vmatprep.subr.mxu0 0.0
        %767 = vmatpush1.msra.mxu0 0.0
        %768 = vmatprep.subr.mxu0 0.0
        %769 = vmatpush1.msra.mxu0 0.0
        %770 = vmatprep.subr.mxu0 0.0
        %771 = vmatpush1.msra.mxu0 0.0
        %772 = vmatprep.subr.mxu0 0.0
        %773 = vmatpush1.msra.mxu0 0.0
        %774 = vmatprep.subr.mxu0 0.0
        %775 = vmatpush1.msra.mxu0 0.0
        %776 = vmatprep.subr.mxu0 0.0
        %777 = vmatpush1.msra.mxu0 0.0
        %778 = vmatprep.subr.mxu0 0.0
        %779 = vmatpush1.msra.mxu0 0.0
        %780 = vmatprep.subr.mxu0 0.0
        %781 = vmatpush1.msra.mxu0 0.0
        %782 = vmatprep.subr.mxu0 0.0
        %783 = vmatpush1.msra.mxu0 0.0
        %784 = vmatprep.subr.mxu0 0.0
        %785 = vmatpush1.msra.mxu0 0.0
        %786 = vmatprep.subr.mxu0 0.0
        %787 = vmatpush1.msra.mxu0 0.0
        %788 = vmatprep.subr.mxu0 0.0
        %789 = vmatpush1.msra.mxu0 0.0
        %790 = vmatprep.subr.mxu0 0.0
        %791 = vmatpush1.msra.mxu0 0.0
        %792 = vmatprep.subr.mxu0 0.0
        %793 = vmatpush1.msra.mxu0 0.0
        %794 = vmatprep.subr.mxu0 0.0
        %795 = vmatpush1.msra.mxu0 0.0
        %796 = vmatprep.subr.mxu0 0.0
        %797 = vmatpush1.msra.mxu0 0.0
        %798 = vmatprep.subr.mxu0 0.0
        %799 = vmatpush1.msra.mxu0 0.0
        %800 = vmatprep.subr.mxu0 0.0
        %801 = vmatpush1.msra.mxu0 0.0
        %802 = vmatprep.subr.mxu0 0.0
        %803 = vmatpush1.msra.mxu0 0.0
        %804 = vmatprep.subr.mxu0 0.0
        %805 = vmatpush1.msra.mxu0 0.0
        %806 = vmatprep.subr.mxu0 0.0
        %807 = vmatpush1.msra.mxu0 0.0
        %808 = vmatprep.subr.mxu0 0.0
        %809 = vmatpush1.msra.mxu0 0.0
        %810 = vmatprep.subr.mxu0 0.0
        %811 = vmatpush1.msra.mxu0 0.0
        %812 = vmatprep.subr.mxu0 0.0
        %813 = vmatpush1.msra.mxu0 0.0
        %814 = vmatprep.subr.mxu0 0.0
        %815 = vmatpush1.msra.mxu0 0.0
        %816 = vmatprep.subr.mxu0 0.0
        %817 = vmatpush1.msra.mxu0 0.0
        %818 = vmatprep.mubr.f32.mxu0 0.0
        %819 = vmatmul.mubr.f32.gmra.mrb[0].mxu0 %v749
        %v820 = vpop.f32.mrb[0].mxu0
        %v821 = vadd.f32 0.0, %v820
        %v822 = vpop.f32.mrb[0].mxu0
        %823 = vdwg.mxu0
        %s824 = scalar_lea.vmem [#allocation5], 256
        %v825 = vld [vmem:[%s824] sm:$0xff]
        %v826 = vld [vmem:[%s824 + $0x8] sm:$0xff]
        %v827 = vld [vmem:[%s824 + $0x10] sm:$0xff]
        %v828 = vld [vmem:[%s824 + $0x18] sm:$0xff]
        %v829 = vld [vmem:[%s824 + $0x20] sm:$0xff]
        %v830 = vld [vmem:[%s824 + $0x28] sm:$0xff]
        %v831 = vld [vmem:[%s824 + $0x30] sm:$0xff]
        %v832 = vld [vmem:[%s824 + $0x38] sm:$0xff]
        %v833 = vld [vmem:[%s824 + $0x40] sm:$0xff]
        %v834 = vld [vmem:[%s824 + $0x48] sm:$0xff]
        %v835 = vld [vmem:[%s824 + $0x50] sm:$0xff]
        %v836 = vld [vmem:[%s824 + $0x58] sm:$0xff]
        %v837 = vld [vmem:[%s824 + $0x60] sm:$0xff]
        %v838 = vld [vmem:[%s824 + $0x68] sm:$0xff]
        %v839 = vld [vmem:[%s824 + $0x70] sm:$0xff]
        %v840 = vld [vmem:[%s824 + $0x78] sm:$0xff]
        %v841 = vld [vmem:[%s824 + $0x80] sm:$0xff]
        %v842 = vld [vmem:[%s824 + $0x88] sm:$0xff]
        %v843 = vld [vmem:[%s824 + $0x90] sm:$0xff]
        %v844 = vld [vmem:[%s824 + $0x98] sm:$0xff]
        %v845 = vld [vmem:[%s824 + $0xa0] sm:$0xff]
        %v846 = vld [vmem:[%s824 + $0xa8] sm:$0xff]
        %v847 = vld [vmem:[%s824 + $0xb0] sm:$0xff]
        %v848 = vld [vmem:[%s824 + $0xb8] sm:$0xff]
        %v849 = vld [vmem:[%s824 + $0xc0] sm:$0xff]
        %v850 = vld [vmem:[%s824 + $0xc8] sm:$0xff]
        %v851 = vld [vmem:[%s824 + $0xd0] sm:$0xff]
        %v852 = vld [vmem:[%s824 + $0xd8] sm:$0xff]
        %v853 = vld [vmem:[%s824 + $0xe0] sm:$0xff]
        %v854 = vld [vmem:[%s824 + $0xe8] sm:$0xff]
        %v855 = vld [vmem:[%s824 + $0xf0] sm:$0xff]
        %v856 = vld [vmem:[%s824 + $0xf8] sm:$0xff]
        %s857 = scalar_lea.vmem %s1, 1
        %v858 = vld [vmem:[%s857] sm:$0x1]
        %860 = vset.pattern.permute.xlu0 0
        %861 = vperm.xlu0 %860, %v858
        %v862 = vpop.permute.xlu0 %861
        %v864 = vlaneseq
        %v865 = vshrl.u32 %v864, 7
        %v866 = vsub.s32 0, %v865
        %v867 = vrot.slane %v862, %v866
        %868 = vmatprep.subr.mxu0 %v826
        %869 = vmatpush1.msra.mxu0 %v825
        %870 = vmatprep.subr.mxu0 %v828
        %871 = vmatpush1.msra.mxu0 %v827
        %872 = vmatprep.subr.mxu0 %v830
        %873 = vmatpush1.msra.mxu0 %v829
        %874 = vmatprep.subr.mxu0 %v832
        %875 = vmatpush1.msra.mxu0 %v831
        %876 = vmatprep.subr.mxu0 %v834
        %877 = vmatpush1.msra.mxu0 %v833
        %878 = vmatprep.subr.mxu0 %v836
        %879 = vmatpush1.msra.mxu0 %v835
        %880 = vmatprep.subr.mxu0 %v838
        %881 = vmatpush1.msra.mxu0 %v837
        %882 = vmatprep.subr.mxu0 %v840
        %883 = vmatpush1.msra.mxu0 %v839
        %884 = vmatprep.subr.mxu0 %v842
        %885 = vmatpush1.msra.mxu0 %v841
        %886 = vmatprep.subr.mxu0 %v844
        %887 = vmatpush1.msra.mxu0 %v843
        %888 = vmatprep.subr.mxu0 %v846
        %889 = vmatpush1.msra.mxu0 %v845
        %890 = vmatprep.subr.mxu0 %v848
        %891 = vmatpush1.msra.mxu0 %v847
        %892 = vmatprep.subr.mxu0 %v850
        %893 = vmatpush1.msra.mxu0 %v849
        %894 = vmatprep.subr.mxu0 %v852
        %895 = vmatpush1.msra.mxu0 %v851
        %896 = vmatprep.subr.mxu0 %v854
        %897 = vmatpush1.msra.mxu0 %v853
        %898 = vmatprep.subr.mxu0 %v856
        %899 = vmatpush1.msra.mxu0 %v855
        %900 = vmatprep.subr.mxu0 0.0
        %901 = vmatpush1.msra.mxu0 0.0
        %902 = vmatprep.subr.mxu0 0.0
        %903 = vmatpush1.msra.mxu0 0.0
        %904 = vmatprep.subr.mxu0 0.0
        %905 = vmatpush1.msra.mxu0 0.0
        %906 = vmatprep.subr.mxu0 0.0
        %907 = vmatpush1.msra.mxu0 0.0
        %908 = vmatprep.subr.mxu0 0.0
        %909 = vmatpush1.msra.mxu0 0.0
        %910 = vmatprep.subr.mxu0 0.0
        %911 = vmatpush1.msra.mxu0 0.0
        %912 = vmatprep.subr.mxu0 0.0
        %913 = vmatpush1.msra.mxu0 0.0
        %914 = vmatprep.subr.mxu0 0.0
        %915 = vmatpush1.msra.mxu0 0.0
        %916 = vmatprep.subr.mxu0 0.0
        %917 = vmatpush1.msra.mxu0 0.0
        %918 = vmatprep.subr.mxu0 0.0
        %919 = vmatpush1.msra.mxu0 0.0
        %920 = vmatprep.subr.mxu0 0.0
        %921 = vmatpush1.msra.mxu0 0.0
        %922 = vmatprep.subr.mxu0 0.0
        %923 = vmatpush1.msra.mxu0 0.0
        %924 = vmatprep.subr.mxu0 0.0
        %925 = vmatpush1.msra.mxu0 0.0
        %926 = vmatprep.subr.mxu0 0.0
        %927 = vmatpush1.msra.mxu0 0.0
        %928 = vmatprep.subr.mxu0 0.0
        %929 = vmatpush1.msra.mxu0 0.0
        %930 = vmatprep.subr.mxu0 0.0
        %931 = vmatpush1.msra.mxu0 0.0
        %932 = vmatprep.mubr.f32.mxu0 0.0
        %933 = vmatmul.mubr.f32.gmra.mrb[0].mxu0 %v821
        %v934 = vpop.f32.mrb[0].mxu0
        %v935 = vadd.f32 %v867, %v934
        %v936 = vpop.f32.mrb[0].mxu0
        %v937 = vadd.f32 %v867, %v936
        %938 = vdwg.mxu0
        %v941 = vcombine.low %v935, %v937
        %v943 = vunpack.c.l.s4 1966171168
        %v944 = vunpack.c.0.s8 %v943
        %v945 = vlaneseq
        %v946 = vshrl.u32 %v945, 7
        %v947 = vsub.s32 %v944, %v946
        %v948 = vrot.slane %v941, %v947
        %v950 = vunpack.c.l.s4 1966171168
        %v951 = vunpack.c.0.s8 %v950
        %v952 = vlaneseq
        %v953 = vshrl.u32 %v952, 7
        %v954 = vsub.s32 %v951, %v953
        %v955 = vrot.slane %v948, %v954
        %s957 = scalar_lea.vmem %s247, 5 [#allocation7]
        %958 = vst.msk [vmem:[%s957] ss:$8 sm:$0x3] %vm742, %v955
        %959 = vst.msk [vmem:[%s957] ss:$8 sm:$0x0] %vm742, %v955
        %s960 = scalar_lea.vmem %s0, 2
        %v961 = vld [vmem:[%s960] sm:$0x1]
        %v963 = vsel %vm530, %v961, 0
        %v966 = vsel %vm534, %v525, 0
        %968 = vmatprep.subr.mxu0 0.0
        %969 = vmatpush1.msra.mxu0 %v966
        %970 = vmatprep.subr.mxu0 0.0
        %971 = vmatpush1.msra.mxu0 0.0
        %972 = vmatprep.subr.mxu0 0.0
        %973 = vmatpush1.msra.mxu0 0.0
        %974 = vmatprep.subr.mxu0 0.0
        %975 = vmatpush1.msra.mxu0 0.0
        %976 = vmatprep.subr.mxu0 0.0
        %977 = vmatpush1.msra.mxu0 0.0
        %978 = vmatprep.subr.mxu0 0.0
        %979 = vmatpush1.msra.mxu0 0.0
        %980 = vmatprep.subr.mxu0 0.0
        %981 = vmatpush1.msra.mxu0 0.0
        %982 = vmatprep.subr.mxu0 0.0
        %983 = vmatpush1.msra.mxu0 0.0
        %984 = vmatprep.subr.mxu0 0.0
        %985 = vmatpush1.msra.mxu0 0.0
        %986 = vmatprep.subr.mxu0 0.0
        %987 = vmatpush1.msra.mxu0 0.0
        %988 = vmatprep.subr.mxu0 0.0
        %989 = vmatpush1.msra.mxu0 0.0
        %990 = vmatprep.subr.mxu0 0.0
        %991 = vmatpush1.msra.mxu0 0.0
        %992 = vmatprep.subr.mxu0 0.0
        %993 = vmatpush1.msra.mxu0 0.0
        %994 = vmatprep.subr.mxu0 0.0
        %995 = vmatpush1.msra.mxu0 0.0
        %996 = vmatprep.subr.mxu0 0.0
        %997 = vmatpush1.msra.mxu0 0.0
        %998 = vmatprep.subr.mxu0 0.0
        %999 = vmatpush1.msra.mxu0 0.0
        %1000 = vmatprep.subr.mxu0 0.0
        %1001 = vmatpush1.msra.mxu0 0.0
        %1002 = vmatprep.subr.mxu0 0.0
        %1003 = vmatpush1.msra.mxu0 0.0
        %1004 = vmatprep.subr.mxu0 0.0
        %1005 = vmatpush1.msra.mxu0 0.0
        %1006 = vmatprep.subr.mxu0 0.0
        %1007 = vmatpush1.msra.mxu0 0.0
        %1008 = vmatprep.subr.mxu0 0.0
        %1009 = vmatpush1.msra.mxu0 0.0
        %1010 = vmatprep.subr.mxu0 0.0
        %1011 = vmatpush1.msra.mxu0 0.0
        %1012 = vmatprep.subr.mxu0 0.0
        %1013 = vmatpush1.msra.mxu0 0.0
        %1014 = vmatprep.subr.mxu0 0.0
        %1015 = vmatpush1.msra.mxu0 0.0
        %1016 = vmatprep.subr.mxu0 0.0
        %1017 = vmatpush1.msra.mxu0 0.0
        %1018 = vmatprep.subr.mxu0 0.0
        %1019 = vmatpush1.msra.mxu0 0.0
        %1020 = vmatprep.subr.mxu0 0.0
        %1021 = vmatpush1.msra.mxu0 0.0
        %1022 = vmatprep.subr.mxu0 0.0
        %1023 = vmatpush1.msra.mxu0 0.0
        %1024 = vmatprep.subr.mxu0 0.0
        %1025 = vmatpush1.msra.mxu0 0.0
        %1026 = vmatprep.subr.mxu0 0.0
        %1027 = vmatpush1.msra.mxu0 0.0
        %1028 = vmatprep.subr.mxu0 0.0
        %1029 = vmatpush1.msra.mxu0 0.0
        %1030 = vmatprep.subr.mxu0 0.0
        %1031 = vmatpush1.msra.mxu0 0.0
        %1032 = vmatprep.mubr.f32.mxu0 0.0
        %1033 = vmatmul.mubr.f32.gmra.mrb[0].mxu0 %v963
        %v1034 = vpop.f32.mrb[0].mxu0
        %v1035 = vadd.f32 0.0, %v1034
        %v1036 = vpop.f32.mrb[0].mxu0
        %1037 = vdwg.mxu0
        %s1038 = scalar_lea.vmem [#allocation5], 512
        %v1039 = vld [vmem:[%s1038] sm:$0xff]
        %v1040 = vld [vmem:[%s1038 + $0x8] sm:$0xff]
        %v1041 = vld [vmem:[%s1038 + $0x10] sm:$0xff]
        %v1042 = vld [vmem:[%s1038 + $0x18] sm:$0xff]
        %v1043 = vld [vmem:[%s1038 + $0x20] sm:$0xff]
        %v1044 = vld [vmem:[%s1038 + $0x28] sm:$0xff]
        %v1045 = vld [vmem:[%s1038 + $0x30] sm:$0xff]
        %v1046 = vld [vmem:[%s1038 + $0x38] sm:$0xff]
        %v1047 = vld [vmem:[%s1038 + $0x40] sm:$0xff]
        %v1048 = vld [vmem:[%s1038 + $0x48] sm:$0xff]
        %v1049 = vld [vmem:[%s1038 + $0x50] sm:$0xff]
        %v1050 = vld [vmem:[%s1038 + $0x58] sm:$0xff]
        %v1051 = vld [vmem:[%s1038 + $0x60] sm:$0xff]
        %v1052 = vld [vmem:[%s1038 + $0x68] sm:$0xff]
        %v1053 = vld [vmem:[%s1038 + $0x70] sm:$0xff]
        %v1054 = vld [vmem:[%s1038 + $0x78] sm:$0xff]
        %v1055 = vld [vmem:[%s1038 + $0x80] sm:$0xff]
        %v1056 = vld [vmem:[%s1038 + $0x88] sm:$0xff]
        %v1057 = vld [vmem:[%s1038 + $0x90] sm:$0xff]
        %v1058 = vld [vmem:[%s1038 + $0x98] sm:$0xff]
        %v1059 = vld [vmem:[%s1038 + $0xa0] sm:$0xff]
        %v1060 = vld [vmem:[%s1038 + $0xa8] sm:$0xff]
        %v1061 = vld [vmem:[%s1038 + $0xb0] sm:$0xff]
        %v1062 = vld [vmem:[%s1038 + $0xb8] sm:$0xff]
        %v1063 = vld [vmem:[%s1038 + $0xc0] sm:$0xff]
        %v1064 = vld [vmem:[%s1038 + $0xc8] sm:$0xff]
        %v1065 = vld [vmem:[%s1038 + $0xd0] sm:$0xff]
        %v1066 = vld [vmem:[%s1038 + $0xd8] sm:$0xff]
        %v1067 = vld [vmem:[%s1038 + $0xe0] sm:$0xff]
        %v1068 = vld [vmem:[%s1038 + $0xe8] sm:$0xff]
        %v1069 = vld [vmem:[%s1038 + $0xf0] sm:$0xff]
        %v1070 = vld [vmem:[%s1038 + $0xf8] sm:$0xff]
        %s1071 = scalar_lea.vmem %s1, 2
        %v1072 = vld [vmem:[%s1071] sm:$0x1]
        %1074 = vset.pattern.permute.xlu0 0
        %1075 = vperm.xlu0 %1074, %v1072
        %v1076 = vpop.permute.xlu0 %1075
        %v1078 = vlaneseq
        %v1079 = vshrl.u32 %v1078, 7
        %v1080 = vsub.s32 0, %v1079
        %v1081 = vrot.slane %v1076, %v1080
        %1082 = vmatprep.subr.mxu0 %v1040
        %1083 = vmatpush1.msra.mxu0 %v1039
        %1084 = vmatprep.subr.mxu0 %v1042
        %1085 = vmatpush1.msra.mxu0 %v1041
        %1086 = vmatprep.subr.mxu0 %v1044
        %1087 = vmatpush1.msra.mxu0 %v1043
        %1088 = vmatprep.subr.mxu0 %v1046
        %1089 = vmatpush1.msra.mxu0 %v1045
        %1090 = vmatprep.subr.mxu0 %v1048
        %1091 = vmatpush1.msra.mxu0 %v1047
        %1092 = vmatprep.subr.mxu0 %v1050
        %1093 = vmatpush1.msra.mxu0 %v1049
        %1094 = vmatprep.subr.mxu0 %v1052
        %1095 = vmatpush1.msra.mxu0 %v1051
        %1096 = vmatprep.subr.mxu0 %v1054
        %1097 = vmatpush1.msra.mxu0 %v1053
        %1098 = vmatprep.subr.mxu0 %v1056
        %1099 = vmatpush1.msra.mxu0 %v1055
        %1100 = vmatprep.subr.mxu0 %v1058
        %1101 = vmatpush1.msra.mxu0 %v1057
        %1102 = vmatprep.subr.mxu0 %v1060
        %1103 = vmatpush1.msra.mxu0 %v1059
        %1104 = vmatprep.subr.mxu0 %v1062
        %1105 = vmatpush1.msra.mxu0 %v1061
        %1106 = vmatprep.subr.mxu0 %v1064
        %1107 = vmatpush1.msra.mxu0 %v1063
        %1108 = vmatprep.subr.mxu0 %v1066
        %1109 = vmatpush1.msra.mxu0 %v1065
        %1110 = vmatprep.subr.mxu0 %v1068
        %1111 = vmatpush1.msra.mxu0 %v1067
        %1112 = vmatprep.subr.mxu0 %v1070
        %1113 = vmatpush1.msra.mxu0 %v1069
        %1114 = vmatprep.subr.mxu0 0.0
        %1115 = vmatpush1.msra.mxu0 0.0
        %1116 = vmatprep.subr.mxu0 0.0
        %1117 = vmatpush1.msra.mxu0 0.0
        %1118 = vmatprep.subr.mxu0 0.0
        %1119 = vmatpush1.msra.mxu0 0.0
        %1120 = vmatprep.subr.mxu0 0.0
        %1121 = vmatpush1.msra.mxu0 0.0
        %1122 = vmatprep.subr.mxu0 0.0
        %1123 = vmatpush1.msra.mxu0 0.0
        %1124 = vmatprep.subr.mxu0 0.0
        %1125 = vmatpush1.msra.mxu0 0.0
        %1126 = vmatprep.subr.mxu0 0.0
        %1127 = vmatpush1.msra.mxu0 0.0
        %1128 = vmatprep.subr.mxu0 0.0
        %1129 = vmatpush1.msra.mxu0 0.0
        %1130 = vmatprep.subr.mxu0 0.0
        %1131 = vmatpush1.msra.mxu0 0.0
        %1132 = vmatprep.subr.mxu0 0.0
        %1133 = vmatpush1.msra.mxu0 0.0
        %1134 = vmatprep.subr.mxu0 0.0
        %1135 = vmatpush1.msra.mxu0 0.0
        %1136 = vmatprep.subr.mxu0 0.0
        %1137 = vmatpush1.msra.mxu0 0.0
        %1138 = vmatprep.subr.mxu0 0.0
        %1139 = vmatpush1.msra.mxu0 0.0
        %1140 = vmatprep.subr.mxu0 0.0
        %1141 = vmatpush1.msra.mxu0 0.0
        %1142 = vmatprep.subr.mxu0 0.0
        %1143 = vmatpush1.msra.mxu0 0.0
        %1144 = vmatprep.subr.mxu0 0.0
        %1145 = vmatpush1.msra.mxu0 0.0
        %1146 = vmatprep.mubr.f32.mxu0 0.0
        %1147 = vmatmul.mubr.f32.gmra.mrb[0].mxu0 %v1035
        %v1148 = vpop.f32.mrb[0].mxu0
        %v1149 = vadd.f32 %v1081, %v1148
        %v1150 = vpop.f32.mrb[0].mxu0
        %v1151 = vadd.f32 %v1081, %v1150
        %1152 = vdwg.mxu0
        %v1155 = vcombine.low %v1149, %v1151
        %v1157 = vunpack.c.l.s4 1966171168
        %v1158 = vunpack.c.0.s8 %v1157
        %v1159 = vlaneseq
        %v1160 = vshrl.u32 %v1159, 7
        %v1161 = vsub.s32 %v1158, %v1160
        %v1162 = vrot.slane %v1155, %v1161
        %v1164 = vunpack.c.l.s4 1966171168
        %v1165 = vunpack.c.0.s8 %v1164
        %v1166 = vlaneseq
        %v1167 = vshrl.u32 %v1166, 7
        %v1168 = vsub.s32 %v1165, %v1167
        %v1169 = vrot.slane %v1162, %v1168
        %s1171 = scalar_lea.vmem %s247, 6 [#allocation7]
        %1172 = vst.msk [vmem:[%s1171] ss:$8 sm:$0x3] %vm742, %v1169
        %1173 = vst.msk [vmem:[%s1171] ss:$8 sm:$0x0] %vm742, %v1169
        %s1174 = scalar_lea.vmem %s0, 3
        %v1175 = vld [vmem:[%s1174] sm:$0x1]
        %v1177 = vsel %vm530, %v1175, 0
        %v1180 = vsel %vm534, %v527, 0
        %1182 = vmatprep.subr.mxu0 0.0
        %1183 = vmatpush1.msra.mxu0 %v1180
        %1184 = vmatprep.subr.mxu0 0.0
        %1185 = vmatpush1.msra.mxu0 0.0
        %1186 = vmatprep.subr.mxu0 0.0
        %1187 = vmatpush1.msra.mxu0 0.0
        %1188 = vmatprep.subr.mxu0 0.0
        %1189 = vmatpush1.msra.mxu0 0.0
        %1190 = vmatprep.subr.mxu0 0.0
        %1191 = vmatpush1.msra.mxu0 0.0
        %1192 = vmatprep.subr.mxu0 0.0
        %1193 = vmatpush1.msra.mxu0 0.0
        %1194 = vmatprep.subr.mxu0 0.0
        %1195 = vmatpush1.msra.mxu0 0.0
        %1196 = vmatprep.subr.mxu0 0.0
        %1197 = vmatpush1.msra.mxu0 0.0
        %1198 = vmatprep.subr.mxu0 0.0
        %1199 = vmatpush1.msra.mxu0 0.0
        %1200 = vmatprep.subr.mxu0 0.0
        %1201 = vmatpush1.msra.mxu0 0.0
        %1202 = vmatprep.subr.mxu0 0.0
        %1203 = vmatpush1.msra.mxu0 0.0
        %1204 = vmatprep.subr.mxu0 0.0
        %1205 = vmatpush1.msra.mxu0 0.0
        %1206 = vmatprep.subr.mxu0 0.0
        %1207 = vmatpush1.msra.mxu0 0.0
        %1208 = vmatprep.subr.mxu0 0.0
        %1209 = vmatpush1.msra.mxu0 0.0
        %1210 = vmatprep.subr.mxu0 0.0
        %1211 = vmatpush1.msra.mxu0 0.0
        %1212 = vmatprep.subr.mxu0 0.0
        %1213 = vmatpush1.msra.mxu0 0.0
        %1214 = vmatprep.subr.mxu0 0.0
        %1215 = vmatpush1.msra.mxu0 0.0
        %1216 = vmatprep.subr.mxu0 0.0
        %1217 = vmatpush1.msra.mxu0 0.0
        %1218 = vmatprep.subr.mxu0 0.0
        %1219 = vmatpush1.msra.mxu0 0.0
        %1220 = vmatprep.subr.mxu0 0.0
        %1221 = vmatpush1.msra.mxu0 0.0
        %1222 = vmatprep.subr.mxu0 0.0
        %1223 = vmatpush1.msra.mxu0 0.0
        %1224 = vmatprep.subr.mxu0 0.0
        %1225 = vmatpush1.msra.mxu0 0.0
        %1226 = vmatprep.subr.mxu0 0.0
        %1227 = vmatpush1.msra.mxu0 0.0
        %1228 = vmatprep.subr.mxu0 0.0
        %1229 = vmatpush1.msra.mxu0 0.0
        %1230 = vmatprep.subr.mxu0 0.0
        %1231 = vmatpush1.msra.mxu0 0.0
        %1232 = vmatprep.subr.mxu0 0.0
        %1233 = vmatpush1.msra.mxu0 0.0
        %1234 = vmatprep.subr.mxu0 0.0
        %1235 = vmatpush1.msra.mxu0 0.0
        %1236 = vmatprep.subr.mxu0 0.0
        %1237 = vmatpush1.msra.mxu0 0.0
        %1238 = vmatprep.subr.mxu0 0.0
        %1239 = vmatpush1.msra.mxu0 0.0
        %1240 = vmatprep.subr.mxu0 0.0
        %1241 = vmatpush1.msra.mxu0 0.0
        %1242 = vmatprep.subr.mxu0 0.0
        %1243 = vmatpush1.msra.mxu0 0.0
        %1244 = vmatprep.subr.mxu0 0.0
        %1245 = vmatpush1.msra.mxu0 0.0
        %1246 = vmatprep.mubr.f32.mxu0 0.0
        %1247 = vmatmul.mubr.f32.gmra.mrb[0].mxu0 %v1177
        %v1248 = vpop.f32.mrb[0].mxu0
        %v1249 = vadd.f32 0.0, %v1248
        %v1250 = vpop.f32.mrb[0].mxu0
        %1251 = vdwg.mxu0
        %s1252 = scalar_lea.vmem [#allocation5], 768
        %v1253 = vld [vmem:[%s1252] sm:$0xff]
        %v1254 = vld [vmem:[%s1252 + $0x8] sm:$0xff]
        %v1255 = vld [vmem:[%s1252 + $0x10] sm:$0xff]
        %v1256 = vld [vmem:[%s1252 + $0x18] sm:$0xff]
        %v1257 = vld [vmem:[%s1252 + $0x20] sm:$0xff]
        %v1258 = vld [vmem:[%s1252 + $0x28] sm:$0xff]
        %v1259 = vld [vmem:[%s1252 + $0x30] sm:$0xff]
        %v1260 = vld [vmem:[%s1252 + $0x38] sm:$0xff]
        %v1261 = vld [vmem:[%s1252 + $0x40] sm:$0xff]
        %v1262 = vld [vmem:[%s1252 + $0x48] sm:$0xff]
        %v1263 = vld [vmem:[%s1252 + $0x50] sm:$0xff]
        %v1264 = vld [vmem:[%s1252 + $0x58] sm:$0xff]
        %v1265 = vld [vmem:[%s1252 + $0x60] sm:$0xff]
        %v1266 = vld [vmem:[%s1252 + $0x68] sm:$0xff]
        %v1267 = vld [vmem:[%s1252 + $0x70] sm:$0xff]
        %v1268 = vld [vmem:[%s1252 + $0x78] sm:$0xff]
        %v1269 = vld [vmem:[%s1252 + $0x80] sm:$0xff]
        %v1270 = vld [vmem:[%s1252 + $0x88] sm:$0xff]
        %v1271 = vld [vmem:[%s1252 + $0x90] sm:$0xff]
        %v1272 = vld [vmem:[%s1252 + $0x98] sm:$0xff]
        %v1273 = vld [vmem:[%s1252 + $0xa0] sm:$0xff]
        %v1274 = vld [vmem:[%s1252 + $0xa8] sm:$0xff]
        %v1275 = vld [vmem:[%s1252 + $0xb0] sm:$0xff]
        %v1276 = vld [vmem:[%s1252 + $0xb8] sm:$0xff]
        %v1277 = vld [vmem:[%s1252 + $0xc0] sm:$0xff]
        %v1278 = vld [vmem:[%s1252 + $0xc8] sm:$0xff]
        %v1279 = vld [vmem:[%s1252 + $0xd0] sm:$0xff]
        %v1280 = vld [vmem:[%s1252 + $0xd8] sm:$0xff]
        %v1281 = vld [vmem:[%s1252 + $0xe0] sm:$0xff]
        %v1282 = vld [vmem:[%s1252 + $0xe8] sm:$0xff]
        %v1283 = vld [vmem:[%s1252 + $0xf0] sm:$0xff]
        %v1284 = vld [vmem:[%s1252 + $0xf8] sm:$0xff]
        %s1285 = scalar_lea.vmem %s1, 3
        %v1286 = vld [vmem:[%s1285] sm:$0x1]
        %1288 = vset.pattern.permute.xlu0 0
        %1289 = vperm.xlu0 %1288, %v1286
        %v1290 = vpop.permute.xlu0 %1289
        %v1292 = vlaneseq
        %v1293 = vshrl.u32 %v1292, 7
        %v1294 = vsub.s32 0, %v1293
        %v1295 = vrot.slane %v1290, %v1294
        %1296 = vmatprep.subr.mxu0 %v1254
        %1297 = vmatpush1.msra.mxu0 %v1253
        %1298 = vmatprep.subr.mxu0 %v1256
        %1299 = vmatpush1.msra.mxu0 %v1255
        %1300 = vmatprep.subr.mxu0 %v1258
        %1301 = vmatpush1.msra.mxu0 %v1257
        %1302 = vmatprep.subr.mxu0 %v1260
        %1303 = vmatpush1.msra.mxu0 %v1259
        %1304 = vmatprep.subr.mxu0 %v1262
        %1305 = vmatpush1.msra.mxu0 %v1261
        %1306 = vmatprep.subr.mxu0 %v1264
        %1307 = vmatpush1.msra.mxu0 %v1263
        %1308 = vmatprep.subr.mxu0 %v1266
        %1309 = vmatpush1.msra.mxu0 %v1265
        %1310 = vmatprep.subr.mxu0 %v1268
        %1311 = vmatpush1.msra.mxu0 %v1267
        %1312 = vmatprep.subr.mxu0 %v1270
        %1313 = vmatpush1.msra.mxu0 %v1269
        %1314 = vmatprep.subr.mxu0 %v1272
        %1315 = vmatpush1.msra.mxu0 %v1271
        %1316 = vmatprep.subr.mxu0 %v1274
        %1317 = vmatpush1.msra.mxu0 %v1273
        %1318 = vmatprep.subr.mxu0 %v1276
        %1319 = vmatpush1.msra.mxu0 %v1275
        %1320 = vmatprep.subr.mxu0 %v1278
        %1321 = vmatpush1.msra.mxu0 %v1277
        %1322 = vmatprep.subr.mxu0 %v1280
        %1323 = vmatpush1.msra.mxu0 %v1279
        %1324 = vmatprep.subr.mxu0 %v1282
        %1325 = vmatpush1.msra.mxu0 %v1281
        %1326 = vmatprep.subr.mxu0 %v1284
        %1327 = vmatpush1.msra.mxu0 %v1283
        %1328 = vmatprep.subr.mxu0 0.0
        %1329 = vmatpush1.msra.mxu0 0.0
        %1330 = vmatprep.subr.mxu0 0.0
        %1331 = vmatpush1.msra.mxu0 0.0
        %1332 = vmatprep.subr.mxu0 0.0
        %1333 = vmatpush1.msra.mxu0 0.0
        %1334 = vmatprep.subr.mxu0 0.0
        %1335 = vmatpush1.msra.mxu0 0.0
        %1336 = vmatprep.subr.mxu0 0.0
        %1337 = vmatpush1.msra.mxu0 0.0
        %1338 = vmatprep.subr.mxu0 0.0
        %1339 = vmatpush1.msra.mxu0 0.0
        %1340 = vmatprep.subr.mxu0 0.0
        %1341 = vmatpush1.msra.mxu0 0.0
        %1342 = vmatprep.subr.mxu0 0.0
        %1343 = vmatpush1.msra.mxu0 0.0
        %1344 = vmatprep.subr.mxu0 0.0
        %1345 = vmatpush1.msra.mxu0 0.0
        %1346 = vmatprep.subr.mxu0 0.0
        %1347 = vmatpush1.msra.mxu0 0.0
        %1348 = vmatprep.subr.mxu0 0.0
        %1349 = vmatpush1.msra.mxu0 0.0
        %1350 = vmatprep.subr.mxu0 0.0
        %1351 = vmatpush1.msra.mxu0 0.0
        %1352 = vmatprep.subr.mxu0 0.0
        %1353 = vmatpush1.msra.mxu0 0.0
        %1354 = vmatprep.subr.mxu0 0.0
        %1355 = vmatpush1.msra.mxu0 0.0
        %1356 = vmatprep.subr.mxu0 0.0
        %1357 = vmatpush1.msra.mxu0 0.0
        %1358 = vmatprep.subr.mxu0 0.0
        %1359 = vmatpush1.msra.mxu0 0.0
        %1360 = vmatprep.mubr.f32.mxu0 0.0
        %1361 = vmatmul.mubr.f32.gmra.mrb[0].mxu0 %v1249
        %v1362 = vpop.f32.mrb[0].mxu0
        %v1363 = vadd.f32 %v1295, %v1362
        %v1364 = vpop.f32.mrb[0].mxu0
        %v1365 = vadd.f32 %v1295, %v1364
        %1366 = vdwg.mxu0
        %v1369 = vcombine.low %v1363, %v1365
        %v1371 = vunpack.c.l.s4 1966171168
        %v1372 = vunpack.c.0.s8 %v1371
        %v1373 = vlaneseq
        %v1374 = vshrl.u32 %v1373, 7
        %v1375 = vsub.s32 %v1372, %v1374
        %v1376 = vrot.slane %v1369, %v1375
        %v1378 = vunpack.c.l.s4 1966171168
        %v1379 = vunpack.c.0.s8 %v1378
        %v1380 = vlaneseq
        %v1381 = vshrl.u32 %v1380, 7
        %v1382 = vsub.s32 %v1379, %v1381
        %v1383 = vrot.slane %v1376, %v1382
        %s1385 = scalar_lea.vmem %s247, 7 [#allocation7]
        %1386 = vst.msk [vmem:[%s1385] ss:$8 sm:$0x3] %vm742, %v1383
        %1387 = vst.msk [vmem:[%s1385] ss:$8 sm:$0x0] %vm742, %v1383
        %s1388 = sand.u32 %s139, 1
        %s1389 = scalar_lea.sflag [#allocation4], %s1388
        %s1390 = sand.u32 %s139, 1
        %s1391 = smul.addr %s1390, 16
        %s1392 = scalar_lea.vmem [#allocation7], %s1391
        // Predicated region
        $region49: #{tpu_custom_call.1} parent=39 // pred_check
          %p1393 = pneg %p149
        $region50: #{tpu_custom_call.1} parent=39 // pred_check_branch
          %1395 = sbr.rel (%p1393) target = $region52
        $region51: #{tpu_custom_call.1} parent=39 // pred_region
          %s1397 = ssub.s32 256, 256
          %1398 = vsyncadd %s1389, %s1397
          %s1399 = smul.addr %s21, 2
          %s1400 = smul.addr %s1399, 128
          %s1401 = scalar_lea.hbm %s5, %s1400
          %s1403 = sshll.u32 %s1392, 4
          %s1404 = int_to_ptr.vmem [resolvable:$true] %s1403
          %1406 = dma.vmem_to_hbm [thread:$0]  %s1404, 256, %s1401, %s1389
        $region52: #{tpu_custom_call.1} parent=39 // pred_fallthru
          _
      $region40: #{tpu_custom_call.1} parent=5 // pred_fallthru
        _
      %p1407 = scmp.le.s32.totalorder 2, %s16
      // Predicated region
      $region53: #{tpu_custom_call.1} parent=5 // pred_check
        %p1408 = pneg %p1407
      $region54: #{tpu_custom_call.1} parent=5 // pred_check_branch
        %1410 = sbr.rel (%p1408) target = $region56
      $region55: #{tpu_custom_call.1} parent=5 // pred_region
        %s1411 = ssub.s32 %s16, 2
        // Predicated region
        $region57: #{tpu_custom_call.1} parent=55 // pred_check
          %p1412 = pneg %p155
        $region58: #{tpu_custom_call.1} parent=55 // pred_check_branch
          %1414 = sbr.rel (%p1412) target = $region60
        $region59: #{tpu_custom_call.1} parent=55 // pred_region
          %s1415 = sand.u32 %s140, 1
          %s1416 = scalar_lea.sflag [#allocation4], %s1415
          %s1417 = sand.u32 %s140, 1
          %s1418 = smul.addr %s1417, 16
          %s1419 = scalar_lea.vmem [#allocation7], %s1418
          %1420 = dma.done %s1416, 256
        $region60: #{tpu_custom_call.1} parent=55 // pred_fallthru
          _
      $region56: #{tpu_custom_call.1} parent=5 // pred_fallthru
        _
    $region6: #{tpu_custom_call.1} parent=1 // loop_footer
      %s20 = sadd.s32 1, %s16
    $region7: #{tpu_custom_call.1} parent=1 // loop_footer_branch
      %15 = sbr.rel target = $region3
    $region8: #{tpu_custom_call.1} parent=1 // loop_exit
      _
    %1421 = vsyncpa [#allocation3], 1
    %s1422 = scalar_lea.sflag [#allocation3], 1
    %1423 = vsyncpa %s1422, 1
    %1424 = vsyncpa [#allocation6], 1
    %1425 = vsyncpa [#allocation4], 1
    %s1426 = scalar_lea.sflag [#allocation4], 1
    %1427 = vsyncpa %s1426, 1

</llo_original>
